<compile_context>
chip_gen: v7x
topology: tpu7x:2x2x1
jax: 0.10.0
libtpu: 0.0.40
codegen_flags: <defaults>
</compile_context>

<pallas_src>
import math

import jax
import jax.numpy as jnp
from jax.experimental import pallas as pl
from jax.experimental.pallas import tpu as pltpu

# --- model config (small, consistent with the module) ---
HIDDEN = 32          # __C.HIDDEN_SIZE
FF = 64              # __C.FF_SIZE
NUM_HEADS = 4        # __C.MULTI_HEAD
HEAD_DIM = HIDDEN // NUM_HEADS   # __C.HIDDEN_SIZE_HEAD
EPS = 1e-6
NEG_INF = -1e9


def _layer_norm(y, g, b):
    mu = jnp.mean(y, axis=-1, keepdims=True)
    var = jnp.sum((y - mu) ** 2, axis=-1, keepdims=True) * (1.0 / (HIDDEN - 1))  # unbiased
    std = jnp.sqrt(var)
    return g * ((y - mu) * pl.reciprocal(std + EPS, approx=True)) + b


def sa_kernel(x_ref, bias_ref,
              wqkv_ref, bqkv_ref, wm_ref, bm_ref,
              w1_ref, b1_ref, w2_ref, b2_ref,
              g1_ref, be1_ref, g2_ref, be2_ref,
              out_ref):
    b_blk, S, H = x_ref.shape
    N = b_blk * S

    x = x_ref[...].astype(jnp.float32).reshape(N, H)   # (N, H) row slab
    mask_bias = bias_ref[...]                           # (b_blk, 1, S), -1e9 where masked

    # --- fused Q/K/V projection (pre-transposed, pre-concatenated weight) ---
    qkv = jnp.dot(x, wqkv_ref[...], preferred_element_type=jnp.float32) + bqkv_ref[...]

    scale = 1.0 / math.sqrt(HEAD_DIM)
    wm = wm_ref[...]                                    # (H, H), hoisted out of head loop
    atted = jnp.zeros((N, H), jnp.float32)

    for h in range(NUM_HEADS):                          # static loop over heads
        lo = h * HEAD_DIM
        q_h = qkv[:, lo:lo + HEAD_DIM].reshape(b_blk, S, HEAD_DIM)
        k_h = qkv[:, H + lo:H + lo + HEAD_DIM].reshape(b_blk, S, HEAD_DIM)
        v_h = qkv[:, 2 * H + lo:2 * H + lo + HEAD_DIM].reshape(b_blk, S, HEAD_DIM)

        s = jnp.einsum('bqd,bkd->bqk', q_h, k_h,
                       preferred_element_type=jnp.float32) * scale
        s = s + mask_bias                               # additive mask bias (broadcast over q)
        p = jnp.exp(s - jnp.max(s, axis=-1, keepdims=True))
        att = p * pl.reciprocal(jnp.sum(p, axis=-1, keepdims=True), approx=True)
        ho = jnp.einsum('bqk,bkd->bqd', att, v_h,
                        preferred_element_type=jnp.float32)      # (b_blk, S, HD)
        # fold linear_merge per head -> no lane-concat of 8-wide head outputs
        atted = atted + jnp.dot(ho.reshape(N, HEAD_DIM),
                                wm[lo:lo + HEAD_DIM, :],
                                preferred_element_type=jnp.float32)
    atted = atted + bm_ref[...]

    # --- residual + LayerNorm 1 ---
    x1 = _layer_norm(x + atted, g1_ref[...], be1_ref[...])

    # --- FFN: Linear -> ReLU -> Linear ---
    h1 = jnp.maximum(
        jnp.dot(x1, w1_ref[...], preferred_element_type=jnp.float32) + b1_ref[...], 0.0)
    ffn = jnp.dot(h1, w2_ref[...], preferred_element_type=jnp.float32) + b2_ref[...]

    # --- residual + LayerNorm 2 ---
    x2 = _layer_norm(x1 + ffn, g2_ref[...], be2_ref[...])
    out_ref[...] = x2.reshape(b_blk, S, H).astype(out_ref.dtype)


def sa_forward(x, x_mask, params, *, block_b=256):
    """x: (B, S, H) float32; x_mask: (B, 1, S) bool/float, nonzero => masked key."""
    (wq, bq, wk, bk, wv, bv, wm, bm, w1, b1, w2, b2, g1, be1, g2, be2) = params
    B, S, H = x.shape
    assert H == HIDDEN

    # Host-side (one-time / folded under jit) packing: pre-transpose + fuse QKV.
    wqkv = jnp.concatenate([wq.T, wk.T, wv.T], axis=1)      # (H, 3H)
    bqkv = jnp.concatenate([bq, bk, bv], axis=1)            # (1, 3H)
    wm_t = wm.T                                             # (H, H)
    w1_t = w1.T                                             # (H, FF)
    w2_t = w2.T                                             # (FF, H)

    mask_bias = x_mask.astype(jnp.float32) * NEG_INF        # (B, 1, S) additive bias

    b_blk = min(block_b, B)
    pad = (-B) % b_blk
    if pad:  # pad batch to a multiple of the block (padded rows are sliced off below)
        x = jnp.pad(x, ((0, pad), (0, 0), (0, 0)))
        mask_bias = jnp.pad(mask_bias, ((0, pad), (0, 0), (0, 0)))
    bp = B + pad

    def const_spec(shape):
        rank = len(shape)
        return pl.BlockSpec(shape, lambda b, _r=rank: (0,) * _r)

    in_specs = [
        pl.BlockSpec((b_blk, S, H), lambda b: (b, 0, 0)),   # x
        pl.BlockSpec((b_blk, 1, S), lambda b: (b, 0, 0)),   # additive mask bias
        const_spec((H, 3 * H)), const_spec((1, 3 * H)),     # fused qkv
        const_spec((H, H)), const_spec((1, H)),             # merge
        const_spec((H, FF)), const_spec((1, FF)),           # ffn layer 1
        const_spec((FF, H)), const_spec((1, H)),            # ffn layer 2
        const_spec((1, H)), const_spec((1, H)),             # ln1 gamma, beta
        const_spec((1, H)), const_spec((1, H)),             # ln2 gamma, beta
    ]

    out = pl.pallas_call(
        sa_kernel,
        out_shape=jax.ShapeDtypeStruct((bp, S, H), x.dtype),
        grid_spec=pltpu.PrefetchScalarGridSpec(
            num_scalar_prefetch=0,
            grid=(bp // b_blk,),
            in_specs=in_specs,
            out_specs=pl.BlockSpec((b_blk, S, H), lambda b: (b, 0, 0)),
        ),
        compiler_params=pltpu.CompilerParams(
            dimension_semantics=("parallel",)),
    )(x, mask_bias, wqkv, bqkv, wm_t, bm, w1_t, b1, w2_t, b2, g1, be1, g2, be2)
    return out[:B]


# --- pure-JAX reference (faithful PyTorch semantics: masked_fill, exact divides) ---
def sa_reference(x, x_mask, params):
    (wq, bq, wk, bk, wv, bv, wm, bm, w1, b1, w2, b2, g1, be1, g2, be2) = params
    B, S, H = x.shape

    def lin(t, w, b):
        return t @ w.T + b

    q = lin(x, wq, bq).reshape(B, S, NUM_HEADS, HEAD_DIM).transpose(0, 2, 1, 3)
    k = lin(x, wk, bk).reshape(B, S, NUM_HEADS, HEAD_DIM).transpose(0, 2, 1, 3)
    v = lin(x, wv, bv).reshape(B, S, NUM_HEADS, HEAD_DIM).transpose(0, 2, 1, 3)
    scores = jnp.einsum("bhqd,bhkd->bhqk", q, k) / math.sqrt(HEAD_DIM)
    scores = jnp.where(x_mask[:, None, :, :], NEG_INF, scores)
    att = jax.nn.softmax(scores, axis=-1)
    atted = jnp.einsum("bhqk,bhkd->bhqd", att, v).transpose(0, 2, 1, 3).reshape(B, S, H)
    atted = lin(atted, wm, bm)

    def ln(y, g, b):
        mu = y.mean(-1, keepdims=True)
        std = jnp.sqrt(((y - mu) ** 2).sum(-1, keepdims=True) / (H - 1))
        return g * (y - mu) / (std + EPS) + b

    x1 = ln(x + atted, g1, be1)
    ffn = lin(jnp.maximum(lin(x1, w1, b1), 0.0), w2, b2)
    return ln(x1 + ffn, g2, be2)


def make_params(key):
    keys = jax.random.split(key, 12)
    scale_h = 1.0 / math.sqrt(HIDDEN)
    scale_f = 1.0 / math.sqrt(FF)
    wq = jax.random.uniform(keys[0], (HIDDEN, HIDDEN), jnp.float32, -scale_h, scale_h)
    bq = jax.random.uniform(keys[1], (1, HIDDEN), jnp.float32, -scale_h, scale_h)
    wk = jax.random.uniform(keys[2], (HIDDEN, HIDDEN), jnp.float32, -scale_h, scale_h)
    bk = jax.random.uniform(keys[3], (1, HIDDEN), jnp.float32, -scale_h, scale_h)
    wv = jax.random.uniform(keys[4], (HIDDEN, HIDDEN), jnp.float32, -scale_h, scale_h)
    bv = jax.random.uniform(keys[5], (1, HIDDEN), jnp.float32, -scale_h, scale_h)
    wm = jax.random.uniform(keys[6], (HIDDEN, HIDDEN), jnp.float32, -scale_h, scale_h)
    bm = jax.random.uniform(keys[7], (1, HIDDEN), jnp.float32, -scale_h, scale_h)
    w1 = jax.random.uniform(keys[8], (FF, HIDDEN), jnp.float32, -scale_h, scale_h)
    b1 = jax.random.uniform(keys[9], (1, FF), jnp.float32, -scale_h, scale_h)
    w2 = jax.random.uniform(keys[10], (HIDDEN, FF), jnp.float32, -scale_f, scale_f)
    b2 = jax.random.uniform(keys[11], (1, HIDDEN), jnp.float32, -scale_f, scale_f)
    g1 = jnp.ones((1, HIDDEN), jnp.float32)
    be1 = jnp.zeros((1, HIDDEN), jnp.float32)
    g2 = jnp.ones((1, HIDDEN), jnp.float32)
    be2 = jnp.zeros((1, HIDDEN), jnp.float32)
    return (wq, bq, wk, bk, wv, bv, wm, bm, w1, b1, w2, b2, g1, be1, g2, be2)


if __name__ == "__main__":
    key = jax.random.PRNGKey(0)
    k_x, k_p = jax.random.split(key)

    B, S = 2, 8
    x = jax.random.normal(k_x, (B, S, HIDDEN), jnp.float32)
    # mask: last 2 key positions of batch 1 are masked; batch 0 unmasked (no fully-masked rows).
    x_mask = jnp.zeros((B, 1, S), bool).at[1, 0, S - 2:].set(True)

    params = make_params(k_p)

    sa_jit = jax.jit(sa_forward)
    out = jax.block_until_ready(sa_jit(x, x_mask, params))

    ref = sa_reference(x, x_mask, params)
    assert out.shape == (B, S, HIDDEN)
    # Tolerance accounts for the EUP approximate-reciprocal fast path used for the
    # softmax denominator and LayerNorm (pl.reciprocal(..., approx=True)).
    assert jnp.allclose(out, ref, rtol=1e-2, atol=1e-2), "mismatch vs pure-JAX reference"

    print("KERNEL_OK")
</pallas_src>

<mosaic_0001>
module attributes {stable_mosaic.version = 11 : i64} {
  func.func @sa_kernel(%arg0: i32, %arg1: memref<2x8x32xf32, #tpu.memory_space<vmem>>, %arg2: memref<2x1x8xf32, #tpu.memory_space<vmem>>, %arg3: memref<32x96xf32, #tpu.memory_space<vmem>>, %arg4: memref<1x96xf32, #tpu.memory_space<vmem>>, %arg5: memref<32x32xf32, #tpu.memory_space<vmem>>, %arg6: memref<1x32xf32, #tpu.memory_space<vmem>>, %arg7: memref<32x64xf32, #tpu.memory_space<vmem>>, %arg8: memref<1x64xf32, #tpu.memory_space<vmem>>, %arg9: memref<64x32xf32, #tpu.memory_space<vmem>>, %arg10: memref<1x32xf32, #tpu.memory_space<vmem>>, %arg11: memref<1x32xf32, #tpu.memory_space<vmem>>, %arg12: memref<1x32xf32, #tpu.memory_space<vmem>>, %arg13: memref<1x32xf32, #tpu.memory_space<vmem>>, %arg14: memref<1x32xf32, #tpu.memory_space<vmem>>, %arg15: memref<2x8x32xf32, #tpu.memory_space<vmem>>) attributes {dimension_semantics = [#tpu.dimension_semantics<parallel>], iteration_bounds = array<i64: 1>, scalar_prefetch = 0 : i64, scratch_operands = 0 : i64, tpu.core_type = #tpu.core_type<tc>, window_params = [{transform_indices = @transform_0, window_bounds = array<i64: 2, 8, 32>}, {transform_indices = @transform_1, window_bounds = array<i64: 2, 1, 8>}, {pipeline_mode = #tpu.pipeline_mode<synchronous>, transform_indices = @transform_2, window_bounds = array<i64: 32, 96>}, {pipeline_mode = #tpu.pipeline_mode<synchronous>, transform_indices = @transform_3, window_bounds = array<i64: 1, 96>}, {pipeline_mode = #tpu.pipeline_mode<synchronous>, transform_indices = @transform_4, window_bounds = array<i64: 32, 32>}, {pipeline_mode = #tpu.pipeline_mode<synchronous>, transform_indices = @transform_5, window_bounds = array<i64: 1, 32>}, {pipeline_mode = #tpu.pipeline_mode<synchronous>, transform_indices = @transform_6, window_bounds = array<i64: 32, 64>}, {pipeline_mode = #tpu.pipeline_mode<synchronous>, transform_indices = @transform_7, window_bounds = array<i64: 1, 64>}, {pipeline_mode = #tpu.pipeline_mode<synchronous>, transform_indices = @transform_8, window_bounds = array<i64: 64, 32>}, {pipeline_mode = #tpu.pipeline_mode<synchronous>, transform_indices = @transform_9, window_bounds = array<i64: 1, 32>}, {pipeline_mode = #tpu.pipeline_mode<synchronous>, transform_indices = @transform_10, window_bounds = array<i64: 1, 32>}, {pipeline_mode = #tpu.pipeline_mode<synchronous>, transform_indices = @transform_11, window_bounds = array<i64: 1, 32>}, {pipeline_mode = #tpu.pipeline_mode<synchronous>, transform_indices = @transform_12, window_bounds = array<i64: 1, 32>}, {pipeline_mode = #tpu.pipeline_mode<synchronous>, transform_indices = @transform_13, window_bounds = array<i64: 1, 32>}, {transform_indices = @transform_14, window_bounds = array<i64: 2, 8, 32>}]} {
    %c0 = arith.constant 0 : index
    %c0_0 = arith.constant 0 : index
    %c0_1 = arith.constant 0 : index
    %0 = vector.load %arg1[%c0, %c0_0, %c0_1] : memref<2x8x32xf32, #tpu.memory_space<vmem>>, vector<2x8x32xf32>
    %1 = vector.shape_cast %0 : vector<2x8x32xf32> to vector<16x32xf32>
    %c0_2 = arith.constant 0 : index
    %c0_3 = arith.constant 0 : index
    %c0_4 = arith.constant 0 : index
    %2 = vector.load %arg2[%c0_2, %c0_3, %c0_4] : memref<2x1x8xf32, #tpu.memory_space<vmem>>, vector<2x1x8xf32>
    %c0_5 = arith.constant 0 : index
    %c0_6 = arith.constant 0 : index
    %3 = vector.load %arg3[%c0_5, %c0_6] : memref<32x96xf32, #tpu.memory_space<vmem>>, vector<32x96xf32>
    %cst = arith.constant dense<0.000000e+00> : vector<16x96xf32>
    %4 = tpu.matmul %1, %3, %cst {dimension_numbers = #tpu.dot_dimension_numbers<[1], [0], [0], [1], [0, 0, 1, 1], [], []>} : vector<16x32xf32>, vector<32x96xf32>, vector<16x96xf32> -> vector<16x96xf32>
    %c0_7 = arith.constant 0 : index
    %c0_8 = arith.constant 0 : index
    %5 = vector.load %arg4[%c0_7, %c0_8] : memref<1x96xf32, #tpu.memory_space<vmem>>, vector<1x96xf32>
    %6 = vector.broadcast %5 : vector<1x96xf32> to vector<16x96xf32>
    %7 = arith.addf %4, %6 : vector<16x96xf32>
    %c0_9 = arith.constant 0 : index
    %c0_10 = arith.constant 0 : index
    %8 = vector.load %arg5[%c0_9, %c0_10] : memref<32x32xf32, #tpu.memory_space<vmem>>, vector<32x32xf32>
    %cst_11 = arith.constant 0.000000e+00 : f32
    %9 = vector.broadcast %cst_11 : f32 to vector<16x32xf32>
    %10 = vector.extract_strided_slice %7 {offsets = [0, 0], sizes = [16, 8], strides = [1, 1]} : vector<16x96xf32> to vector<16x8xf32>
    %11 = vector.shape_cast %10 : vector<16x8xf32> to vector<2x8x8xf32>
    %12 = vector.extract_strided_slice %7 {offsets = [0, 32], sizes = [16, 8], strides = [1, 1]} : vector<16x96xf32> to vector<16x8xf32>
    %13 = vector.shape_cast %12 : vector<16x8xf32> to vector<2x8x8xf32>
    %14 = vector.extract_strided_slice %7 {offsets = [0, 64], sizes = [16, 8], strides = [1, 1]} : vector<16x96xf32> to vector<16x8xf32>
    %15 = vector.shape_cast %14 : vector<16x8xf32> to vector<2x8x8xf32>
    "tpu.trace_start"() <{level = 10 : i32, message = "bqd,bkd->bqk"}> : () -> ()
    %cst_12 = arith.constant dense<0.000000e+00> : vector<2x8x8xf32>
    %16 = tpu.matmul %11, %13, %cst_12 {dimension_numbers = #tpu.dot_dimension_numbers<[2], [2], [1], [1], [0, 0, 0, 1, 1, 1], [0], [0]>} : vector<2x8x8xf32>, vector<2x8x8xf32>, vector<2x8x8xf32> -> vector<2x8x8xf32>
    "tpu.trace_stop"() : () -> ()
    %cst_13 = arith.constant 0.353553385 : f32
    %17 = vector.broadcast %cst_13 : f32 to vector<2x8x8xf32>
    %18 = arith.mulf %16, %17 : vector<2x8x8xf32>
    %19 = vector.broadcast %2 : vector<2x1x8xf32> to vector<2x8x8xf32>
    %20 = arith.addf %18, %19 : vector<2x8x8xf32>
    %cst_14 = arith.constant dense<0xFF800000> : vector<2x8xf32>
    %21 = vector.multi_reduction <maximumf>, %20, %cst_14 [2] : vector<2x8x8xf32> to vector<2x8xf32>
    %22 = vector.shape_cast %21 : vector<2x8xf32> to vector<2x8x1xf32>
    %23 = vector.broadcast %22 : vector<2x8x1xf32> to vector<2x8x8xf32>
    %24 = arith.subf %20, %23 : vector<2x8x8xf32>
    %25 = math.exp %24 : vector<2x8x8xf32>
    %cst_15 = arith.constant dense<0.000000e+00> : vector<2x8xf32>
    %26 = vector.multi_reduction <add>, %25, %cst_15 [2] : vector<2x8x8xf32> to vector<2x8xf32>
    %27 = vector.shape_cast %26 : vector<2x8xf32> to vector<2x8x1xf32>
    %28 = tpu.reciprocal %27 {approx = true} : vector<2x8x1xf32> -> vector<2x8x1xf32>
    %29 = vector.broadcast %28 : vector<2x8x1xf32> to vector<2x8x8xf32>
    %30 = arith.mulf %25, %29 : vector<2x8x8xf32>
    "tpu.trace_start"() <{level = 10 : i32, message = "bqk,bkd->bqd"}> : () -> ()
    %cst_16 = arith.constant dense<0.000000e+00> : vector<2x8x8xf32>
    %31 = tpu.matmul %30, %15, %cst_16 {dimension_numbers = #tpu.dot_dimension_numbers<[2], [1], [1], [2], [0, 0, 0, 1, 1, 2], [0], [0]>} : vector<2x8x8xf32>, vector<2x8x8xf32>, vector<2x8x8xf32> -> vector<2x8x8xf32>
    "tpu.trace_stop"() : () -> ()
    %32 = vector.shape_cast %31 : vector<2x8x8xf32> to vector<16x8xf32>
    %33 = vector.extract_strided_slice %8 {offsets = [0, 0], sizes = [8, 32], strides = [1, 1]} : vector<32x32xf32> to vector<8x32xf32>
    %cst_17 = arith.constant dense<0.000000e+00> : vector<16x32xf32>
    %34 = tpu.matmul %32, %33, %cst_17 {dimension_numbers = #tpu.dot_dimension_numbers<[1], [0], [0], [1], [0, 0, 1, 1], [], []>} : vector<16x8xf32>, vector<8x32xf32>, vector<16x32xf32> -> vector<16x32xf32>
    %35 = arith.addf %9, %34 : vector<16x32xf32>
    %36 = vector.extract_strided_slice %7 {offsets = [0, 8], sizes = [16, 8], strides = [1, 1]} : vector<16x96xf32> to vector<16x8xf32>
    %37 = vector.shape_cast %36 : vector<16x8xf32> to vector<2x8x8xf32>
    %38 = vector.extract_strided_slice %7 {offsets = [0, 40], sizes = [16, 8], strides = [1, 1]} : vector<16x96xf32> to vector<16x8xf32>
    %39 = vector.shape_cast %38 : vector<16x8xf32> to vector<2x8x8xf32>
    %40 = vector.extract_strided_slice %7 {offsets = [0, 72], sizes = [16, 8], strides = [1, 1]} : vector<16x96xf32> to vector<16x8xf32>
    %41 = vector.shape_cast %40 : vector<16x8xf32> to vector<2x8x8xf32>
    "tpu.trace_start"() <{level = 10 : i32, message = "bqd,bkd->bqk"}> : () -> ()
    %cst_18 = arith.constant dense<0.000000e+00> : vector<2x8x8xf32>
    %42 = tpu.matmul %37, %39, %cst_18 {dimension_numbers = #tpu.dot_dimension_numbers<[2], [2], [1], [1], [0, 0, 0, 1, 1, 1], [0], [0]>} : vector<2x8x8xf32>, vector<2x8x8xf32>, vector<2x8x8xf32> -> vector<2x8x8xf32>
    "tpu.trace_stop"() : () -> ()
    %cst_19 = arith.constant 0.353553385 : f32
    %43 = vector.broadcast %cst_19 : f32 to vector<2x8x8xf32>
    %44 = arith.mulf %42, %43 : vector<2x8x8xf32>
    %45 = vector.broadcast %2 : vector<2x1x8xf32> to vector<2x8x8xf32>
    %46 = arith.addf %44, %45 : vector<2x8x8xf32>
    %cst_20 = arith.constant dense<0xFF800000> : vector<2x8xf32>
    %47 = vector.multi_reduction <maximumf>, %46, %cst_20 [2] : vector<2x8x8xf32> to vector<2x8xf32>
    %48 = vector.shape_cast %47 : vector<2x8xf32> to vector<2x8x1xf32>
    %49 = vector.broadcast %48 : vector<2x8x1xf32> to vector<2x8x8xf32>
    %50 = arith.subf %46, %49 : vector<2x8x8xf32>
    %51 = math.exp %50 : vector<2x8x8xf32>
    %cst_21 = arith.constant dense<0.000000e+00> : vector<2x8xf32>
    %52 = vector.multi_reduction <add>, %51, %cst_21 [2] : vector<2x8x8xf32> to vector<2x8xf32>
    %53 = vector.shape_cast %52 : vector<2x8xf32> to vector<2x8x1xf32>
    %54 = tpu.reciprocal %53 {approx = true} : vector<2x8x1xf32> -> vector<2x8x1xf32>
    %55 = vector.broadcast %54 : vector<2x8x1xf32> to vector<2x8x8xf32>
    %56 = arith.mulf %51, %55 : vector<2x8x8xf32>
    "tpu.trace_start"() <{level = 10 : i32, message = "bqk,bkd->bqd"}> : () -> ()
    %cst_22 = arith.constant dense<0.000000e+00> : vector<2x8x8xf32>
    %57 = tpu.matmul %56, %41, %cst_22 {dimension_numbers = #tpu.dot_dimension_numbers<[2], [1], [1], [2], [0, 0, 0, 1, 1, 2], [0], [0]>} : vector<2x8x8xf32>, vector<2x8x8xf32>, vector<2x8x8xf32> -> vector<2x8x8xf32>
    "tpu.trace_stop"() : () -> ()
    %58 = vector.shape_cast %57 : vector<2x8x8xf32> to vector<16x8xf32>
    %59 = vector.extract_strided_slice %8 {offsets = [8, 0], sizes = [8, 32], strides = [1, 1]} : vector<32x32xf32> to vector<8x32xf32>
    %cst_23 = arith.constant dense<0.000000e+00> : vector<16x32xf32>
    %60 = tpu.matmul %58, %59, %cst_23 {dimension_numbers = #tpu.dot_dimension_numbers<[1], [0], [0], [1], [0, 0, 1, 1], [], []>} : vector<16x8xf32>, vector<8x32xf32>, vector<16x32xf32> -> vector<16x32xf32>
    %61 = arith.addf %35, %60 : vector<16x32xf32>
    %62 = vector.extract_strided_slice %7 {offsets = [0, 16], sizes = [16, 8], strides = [1, 1]} : vector<16x96xf32> to vector<16x8xf32>
    %63 = vector.shape_cast %62 : vector<16x8xf32> to vector<2x8x8xf32>
    %64 = vector.extract_strided_slice %7 {offsets = [0, 48], sizes = [16, 8], strides = [1, 1]} : vector<16x96xf32> to vector<16x8xf32>
    %65 = vector.shape_cast %64 : vector<16x8xf32> to vector<2x8x8xf32>
    %66 = vector.extract_strided_slice %7 {offsets = [0, 80], sizes = [16, 8], strides = [1, 1]} : vector<16x96xf32> to vector<16x8xf32>
    %67 = vector.shape_cast %66 : vector<16x8xf32> to vector<2x8x8xf32>
    "tpu.trace_start"() <{level = 10 : i32, message = "bqd,bkd->bqk"}> : () -> ()
    %cst_24 = arith.constant dense<0.000000e+00> : vector<2x8x8xf32>
    %68 = tpu.matmul %63, %65, %cst_24 {dimension_numbers = #tpu.dot_dimension_numbers<[2], [2], [1], [1], [0, 0, 0, 1, 1, 1], [0], [0]>} : vector<2x8x8xf32>, vector<2x8x8xf32>, vector<2x8x8xf32> -> vector<2x8x8xf32>
    "tpu.trace_stop"() : () -> ()
    %cst_25 = arith.constant 0.353553385 : f32
    %69 = vector.broadcast %cst_25 : f32 to vector<2x8x8xf32>
    %70 = arith.mulf %68, %69 : vector<2x8x8xf32>
    %71 = vector.broadcast %2 : vector<2x1x8xf32> to vector<2x8x8xf32>
    %72 = arith.addf %70, %71 : vector<2x8x8xf32>
    %cst_26 = arith.constant dense<0xFF800000> : vector<2x8xf32>
    %73 = vector.multi_reduction <maximumf>, %72, %cst_26 [2] : vector<2x8x8xf32> to vector<2x8xf32>
    %74 = vector.shape_cast %73 : vector<2x8xf32> to vector<2x8x1xf32>
    %75 = vector.broadcast %74 : vector<2x8x1xf32> to vector<2x8x8xf32>
    %76 = arith.subf %72, %75 : vector<2x8x8xf32>
    %77 = math.exp %76 : vector<2x8x8xf32>
    %cst_27 = arith.constant dense<0.000000e+00> : vector<2x8xf32>
    %78 = vector.multi_reduction <add>, %77, %cst_27 [2] : vector<2x8x8xf32> to vector<2x8xf32>
    %79 = vector.shape_cast %78 : vector<2x8xf32> to vector<2x8x1xf32>
    %80 = tpu.reciprocal %79 {approx = true} : vector<2x8x1xf32> -> vector<2x8x1xf32>
    %81 = vector.broadcast %80 : vector<2x8x1xf32> to vector<2x8x8xf32>
    %82 = arith.mulf %77, %81 : vector<2x8x8xf32>
    "tpu.trace_start"() <{level = 10 : i32, message = "bqk,bkd->bqd"}> : () -> ()
    %cst_28 = arith.constant dense<0.000000e+00> : vector<2x8x8xf32>
    %83 = tpu.matmul %82, %67, %cst_28 {dimension_numbers = #tpu.dot_dimension_numbers<[2], [1], [1], [2], [0, 0, 0, 1, 1, 2], [0], [0]>} : vector<2x8x8xf32>, vector<2x8x8xf32>, vector<2x8x8xf32> -> vector<2x8x8xf32>
    "tpu.trace_stop"() : () -> ()
    %84 = vector.shape_cast %83 : vector<2x8x8xf32> to vector<16x8xf32>
    %85 = vector.extract_strided_slice %8 {offsets = [16, 0], sizes = [8, 32], strides = [1, 1]} : vector<32x32xf32> to vector<8x32xf32>
    %cst_29 = arith.constant dense<0.000000e+00> : vector<16x32xf32>
    %86 = tpu.matmul %84, %85, %cst_29 {dimension_numbers = #tpu.dot_dimension_numbers<[1], [0], [0], [1], [0, 0, 1, 1], [], []>} : vector<16x8xf32>, vector<8x32xf32>, vector<16x32xf32> -> vector<16x32xf32>
    %87 = arith.addf %61, %86 : vector<16x32xf32>
    %88 = vector.extract_strided_slice %7 {offsets = [0, 24], sizes = [16, 8], strides = [1, 1]} : vector<16x96xf32> to vector<16x8xf32>
    %89 = vector.shape_cast %88 : vector<16x8xf32> to vector<2x8x8xf32>
    %90 = vector.extract_strided_slice %7 {offsets = [0, 56], sizes = [16, 8], strides = [1, 1]} : vector<16x96xf32> to vector<16x8xf32>
    %91 = vector.shape_cast %90 : vector<16x8xf32> to vector<2x8x8xf32>
    %92 = vector.extract_strided_slice %7 {offsets = [0, 88], sizes = [16, 8], strides = [1, 1]} : vector<16x96xf32> to vector<16x8xf32>
    %93 = vector.shape_cast %92 : vector<16x8xf32> to vector<2x8x8xf32>
    "tpu.trace_start"() <{level = 10 : i32, message = "bqd,bkd->bqk"}> : () -> ()
    %cst_30 = arith.constant dense<0.000000e+00> : vector<2x8x8xf32>
    %94 = tpu.matmul %89, %91, %cst_30 {dimension_numbers = #tpu.dot_dimension_numbers<[2], [2], [1], [1], [0, 0, 0, 1, 1, 1], [0], [0]>} : vector<2x8x8xf32>, vector<2x8x8xf32>, vector<2x8x8xf32> -> vector<2x8x8xf32>
    "tpu.trace_stop"() : () -> ()
    %cst_31 = arith.constant 0.353553385 : f32
    %95 = vector.broadcast %cst_31 : f32 to vector<2x8x8xf32>
    %96 = arith.mulf %94, %95 : vector<2x8x8xf32>
    %97 = vector.broadcast %2 : vector<2x1x8xf32> to vector<2x8x8xf32>
    %98 = arith.addf %96, %97 : vector<2x8x8xf32>
    %cst_32 = arith.constant dense<0xFF800000> : vector<2x8xf32>
    %99 = vector.multi_reduction <maximumf>, %98, %cst_32 [2] : vector<2x8x8xf32> to vector<2x8xf32>
    %100 = vector.shape_cast %99 : vector<2x8xf32> to vector<2x8x1xf32>
    %101 = vector.broadcast %100 : vector<2x8x1xf32> to vector<2x8x8xf32>
    %102 = arith.subf %98, %101 : vector<2x8x8xf32>
    %103 = math.exp %102 : vector<2x8x8xf32>
    %cst_33 = arith.constant dense<0.000000e+00> : vector<2x8xf32>
    %104 = vector.multi_reduction <add>, %103, %cst_33 [2] : vector<2x8x8xf32> to vector<2x8xf32>
    %105 = vector.shape_cast %104 : vector<2x8xf32> to vector<2x8x1xf32>
    %106 = tpu.reciprocal %105 {approx = true} : vector<2x8x1xf32> -> vector<2x8x1xf32>
    %107 = vector.broadcast %106 : vector<2x8x1xf32> to vector<2x8x8xf32>
    %108 = arith.mulf %103, %107 : vector<2x8x8xf32>
    "tpu.trace_start"() <{level = 10 : i32, message = "bqk,bkd->bqd"}> : () -> ()
    %cst_34 = arith.constant dense<0.000000e+00> : vector<2x8x8xf32>
    %109 = tpu.matmul %108, %93, %cst_34 {dimension_numbers = #tpu.dot_dimension_numbers<[2], [1], [1], [2], [0, 0, 0, 1, 1, 2], [0], [0]>} : vector<2x8x8xf32>, vector<2x8x8xf32>, vector<2x8x8xf32> -> vector<2x8x8xf32>
    "tpu.trace_stop"() : () -> ()
    %110 = vector.shape_cast %109 : vector<2x8x8xf32> to vector<16x8xf32>
    %111 = vector.extract_strided_slice %8 {offsets = [24, 0], sizes = [8, 32], strides = [1, 1]} : vector<32x32xf32> to vector<8x32xf32>
    %cst_35 = arith.constant dense<0.000000e+00> : vector<16x32xf32>
    %112 = tpu.matmul %110, %111, %cst_35 {dimension_numbers = #tpu.dot_dimension_numbers<[1], [0], [0], [1], [0, 0, 1, 1], [], []>} : vector<16x8xf32>, vector<8x32xf32>, vector<16x32xf32> -> vector<16x32xf32>
    %113 = arith.addf %87, %112 : vector<16x32xf32>
    %c0_36 = arith.constant 0 : index
    %c0_37 = arith.constant 0 : index
    %114 = vector.load %arg6[%c0_36, %c0_37] : memref<1x32xf32, #tpu.memory_space<vmem>>, vector<1x32xf32>
    %115 = vector.broadcast %114 : vector<1x32xf32> to vector<16x32xf32>
    %116 = arith.addf %113, %115 : vector<16x32xf32>
    %117 = arith.addf %1, %116 : vector<16x32xf32>
    %c0_38 = arith.constant 0 : index
    %c0_39 = arith.constant 0 : index
    %118 = vector.load %arg11[%c0_38, %c0_39] : memref<1x32xf32, #tpu.memory_space<vmem>>, vector<1x32xf32>
    %c0_40 = arith.constant 0 : index
    %c0_41 = arith.constant 0 : index
    %119 = vector.load %arg12[%c0_40, %c0_41] : memref<1x32xf32, #tpu.memory_space<vmem>>, vector<1x32xf32>
    %cst_42 = arith.constant dense<0.000000e+00> : vector<16xf32>
    %120 = vector.multi_reduction <add>, %117, %cst_42 [1] : vector<16x32xf32> to vector<16xf32>
    %121 = vector.shape_cast %120 : vector<16xf32> to vector<16x1xf32>
    %cst_43 = arith.constant 3.200000e+01 : f32
    %122 = vector.broadcast %cst_43 : f32 to vector<16x1xf32>
    %123 = arith.divf %121, %122 : vector<16x1xf32>
    %124 = vector.broadcast %123 : vector<16x1xf32> to vector<16x32xf32>
    %125 = arith.subf %117, %124 : vector<16x32xf32>
    %126 = arith.mulf %125, %125 : vector<16x32xf32>
    %cst_44 = arith.constant dense<0.000000e+00> : vector<16xf32>
    %127 = vector.multi_reduction <add>, %126, %cst_44 [1] : vector<16x32xf32> to vector<16xf32>
    %128 = vector.shape_cast %127 : vector<16xf32> to vector<16x1xf32>
    %cst_45 = arith.constant 0.0322580636 : f32
    %129 = vector.broadcast %cst_45 : f32 to vector<16x1xf32>
    %130 = arith.mulf %128, %129 : vector<16x1xf32>
    %131 = math.sqrt %130 : vector<16x1xf32>
    %132 = vector.broadcast %123 : vector<16x1xf32> to vector<16x32xf32>
    %133 = arith.subf %117, %132 : vector<16x32xf32>
    %cst_46 = arith.constant 9.99999997E-7 : f32
    %134 = vector.broadcast %cst_46 : f32 to vector<16x1xf32>
    %135 = arith.addf %131, %134 : vector<16x1xf32>
    %136 = tpu.reciprocal %135 {approx = true} : vector<16x1xf32> -> vector<16x1xf32>
    %137 = vector.broadcast %136 : vector<16x1xf32> to vector<16x32xf32>
    %138 = arith.mulf %133, %137 : vector<16x32xf32>
    %139 = vector.broadcast %118 : vector<1x32xf32> to vector<16x32xf32>
    %140 = arith.mulf %139, %138 : vector<16x32xf32>
    %141 = vector.broadcast %119 : vector<1x32xf32> to vector<16x32xf32>
    %142 = arith.addf %140, %141 : vector<16x32xf32>
    %c0_47 = arith.constant 0 : index
    %c0_48 = arith.constant 0 : index
    %143 = vector.load %arg7[%c0_47, %c0_48] : memref<32x64xf32, #tpu.memory_space<vmem>>, vector<32x64xf32>
    %cst_49 = arith.constant dense<0.000000e+00> : vector<16x64xf32>
    %144 = tpu.matmul %142, %143, %cst_49 {dimension_numbers = #tpu.dot_dimension_numbers<[1], [0], [0], [1], [0, 0, 1, 1], [], []>} : vector<16x32xf32>, vector<32x64xf32>, vector<16x64xf32> -> vector<16x64xf32>
    %c0_50 = arith.constant 0 : index
    %c0_51 = arith.constant 0 : index
    %145 = vector.load %arg8[%c0_50, %c0_51] : memref<1x64xf32, #tpu.memory_space<vmem>>, vector<1x64xf32>
    %146 = vector.broadcast %145 : vector<1x64xf32> to vector<16x64xf32>
    %147 = arith.addf %144, %146 : vector<16x64xf32>
    %cst_52 = arith.constant 0.000000e+00 : f32
    %148 = vector.broadcast %cst_52 : f32 to vector<16x64xf32>
    %149 = arith.maximumf %147, %148 : vector<16x64xf32>
    %c0_53 = arith.constant 0 : index
    %c0_54 = arith.constant 0 : index
    %150 = vector.load %arg9[%c0_53, %c0_54] : memref<64x32xf32, #tpu.memory_space<vmem>>, vector<64x32xf32>
    %cst_55 = arith.constant dense<0.000000e+00> : vector<16x32xf32>
    %151 = tpu.matmul %149, %150, %cst_55 {dimension_numbers = #tpu.dot_dimension_numbers<[1], [0], [0], [1], [0, 0, 1, 1], [], []>} : vector<16x64xf32>, vector<64x32xf32>, vector<16x32xf32> -> vector<16x32xf32>
    %c0_56 = arith.constant 0 : index
    %c0_57 = arith.constant 0 : index
    %152 = vector.load %arg10[%c0_56, %c0_57] : memref<1x32xf32, #tpu.memory_space<vmem>>, vector<1x32xf32>
    %153 = vector.broadcast %152 : vector<1x32xf32> to vector<16x32xf32>
    %154 = arith.addf %151, %153 : vector<16x32xf32>
    %155 = arith.addf %142, %154 : vector<16x32xf32>
    %c0_58 = arith.constant 0 : index
    %c0_59 = arith.constant 0 : index
    %156 = vector.load %arg13[%c0_58, %c0_59] : memref<1x32xf32, #tpu.memory_space<vmem>>, vector<1x32xf32>
    %c0_60 = arith.constant 0 : index
    %c0_61 = arith.constant 0 : index
    %157 = vector.load %arg14[%c0_60, %c0_61] : memref<1x32xf32, #tpu.memory_space<vmem>>, vector<1x32xf32>
    %cst_62 = arith.constant dense<0.000000e+00> : vector<16xf32>
    %158 = vector.multi_reduction <add>, %155, %cst_62 [1] : vector<16x32xf32> to vector<16xf32>
    %159 = vector.shape_cast %158 : vector<16xf32> to vector<16x1xf32>
    %cst_63 = arith.constant 3.200000e+01 : f32
    %160 = vector.broadcast %cst_63 : f32 to vector<16x1xf32>
    %161 = arith.divf %159, %160 : vector<16x1xf32>
    %162 = vector.broadcast %161 : vector<16x1xf32> to vector<16x32xf32>
    %163 = arith.subf %155, %162 : vector<16x32xf32>
    %164 = arith.mulf %163, %163 : vector<16x32xf32>
    %cst_64 = arith.constant dense<0.000000e+00> : vector<16xf32>
    %165 = vector.multi_reduction <add>, %164, %cst_64 [1] : vector<16x32xf32> to vector<16xf32>
    %166 = vector.shape_cast %165 : vector<16xf32> to vector<16x1xf32>
    %cst_65 = arith.constant 0.0322580636 : f32
    %167 = vector.broadcast %cst_65 : f32 to vector<16x1xf32>
    %168 = arith.mulf %166, %167 : vector<16x1xf32>
    %169 = math.sqrt %168 : vector<16x1xf32>
    %170 = vector.broadcast %161 : vector<16x1xf32> to vector<16x32xf32>
    %171 = arith.subf %155, %170 : vector<16x32xf32>
    %cst_66 = arith.constant 9.99999997E-7 : f32
    %172 = vector.broadcast %cst_66 : f32 to vector<16x1xf32>
    %173 = arith.addf %169, %172 : vector<16x1xf32>
    %174 = tpu.reciprocal %173 {approx = true} : vector<16x1xf32> -> vector<16x1xf32>
    %175 = vector.broadcast %174 : vector<16x1xf32> to vector<16x32xf32>
    %176 = arith.mulf %171, %175 : vector<16x32xf32>
    %177 = vector.broadcast %156 : vector<1x32xf32> to vector<16x32xf32>
    %178 = arith.mulf %177, %176 : vector<16x32xf32>
    %179 = vector.broadcast %157 : vector<1x32xf32> to vector<16x32xf32>
    %180 = arith.addf %178, %179 : vector<16x32xf32>
    %181 = vector.shape_cast %180 : vector<16x32xf32> to vector<2x8x32xf32>
    %c0_67 = arith.constant 0 : index
    %c0_68 = arith.constant 0 : index
    %c0_69 = arith.constant 0 : index
    %182 = vector.load %arg15[%c0_67, %c0_68, %c0_69] : memref<2x8x32xf32, #tpu.memory_space<vmem>>, vector<2x8x32xf32>
    tpu.vector_store %arg15[%c0_67, %c0_68, %c0_69], %181 {strides = array<i32>} : memref<2x8x32xf32, #tpu.memory_space<vmem>>, vector<2x8x32xf32>,
    return
  }
  func.func @transform_0(%arg0: i32) -> (i32, i32, i32) {
    %c0_i32 = arith.constant 0 : i32
    %c0_i32_0 = arith.constant 0 : i32
    %c0_i32_1 = arith.constant 0 : i32
    return %arg0, %c0_i32, %c0_i32_0 : i32, i32, i32
  }
  func.func @transform_1(%arg0: i32) -> (i32, i32, i32) {
    %c0_i32 = arith.constant 0 : i32
    %c0_i32_0 = arith.constant 0 : i32
    %c0_i32_1 = arith.constant 0 : i32
    return %arg0, %c0_i32, %c0_i32_0 : i32, i32, i32
  }
  func.func @transform_2(%arg0: i32) -> (i32, i32) {
    %c0_i32 = arith.constant 0 : i32
    %c0_i32_0 = arith.constant 0 : i32
    %c0_i32_1 = arith.constant 0 : i32
    return %c0_i32, %c0_i32_0 : i32, i32
  }
  func.func @transform_3(%arg0: i32) -> (i32, i32) {
    %c0_i32 = arith.constant 0 : i32
    %c0_i32_0 = arith.constant 0 : i32
    %c0_i32_1 = arith.constant 0 : i32
    return %c0_i32, %c0_i32_0 : i32, i32
  }
  func.func @transform_4(%arg0: i32) -> (i32, i32) {
    %c0_i32 = arith.constant 0 : i32
    %c0_i32_0 = arith.constant 0 : i32
    %c0_i32_1 = arith.constant 0 : i32
    return %c0_i32, %c0_i32_0 : i32, i32
  }
  func.func @transform_5(%arg0: i32) -> (i32, i32) {
    %c0_i32 = arith.constant 0 : i32
    %c0_i32_0 = arith.constant 0 : i32
    %c0_i32_1 = arith.constant 0 : i32
    return %c0_i32, %c0_i32_0 : i32, i32
  }
  func.func @transform_6(%arg0: i32) -> (i32, i32) {
    %c0_i32 = arith.constant 0 : i32
    %c0_i32_0 = arith.constant 0 : i32
    %c0_i32_1 = arith.constant 0 : i32
    return %c0_i32, %c0_i32_0 : i32, i32
  }
  func.func @transform_7(%arg0: i32) -> (i32, i32) {
    %c0_i32 = arith.constant 0 : i32
    %c0_i32_0 = arith.constant 0 : i32
    %c0_i32_1 = arith.constant 0 : i32
    return %c0_i32, %c0_i32_0 : i32, i32
  }
  func.func @transform_8(%arg0: i32) -> (i32, i32) {
    %c0_i32 = arith.constant 0 : i32
    %c0_i32_0 = arith.constant 0 : i32
    %c0_i32_1 = arith.constant 0 : i32
    return %c0_i32, %c0_i32_0 : i32, i32
  }
  func.func @transform_9(%arg0: i32) -> (i32, i32) {
    %c0_i32 = arith.constant 0 : i32
    %c0_i32_0 = arith.constant 0 : i32
    %c0_i32_1 = arith.constant 0 : i32
    return %c0_i32, %c0_i32_0 : i32, i32
  }
  func.func @transform_10(%arg0: i32) -> (i32, i32) {
    %c0_i32 = arith.constant 0 : i32
    %c0_i32_0 = arith.constant 0 : i32
    %c0_i32_1 = arith.constant 0 : i32
    return %c0_i32, %c0_i32_0 : i32, i32
  }
  func.func @transform_11(%arg0: i32) -> (i32, i32) {
    %c0_i32 = arith.constant 0 : i32
    %c0_i32_0 = arith.constant 0 : i32
    %c0_i32_1 = arith.constant 0 : i32
    return %c0_i32, %c0_i32_0 : i32, i32
  }
  func.func @transform_12(%arg0: i32) -> (i32, i32) {
    %c0_i32 = arith.constant 0 : i32
    %c0_i32_0 = arith.constant 0 : i32
    %c0_i32_1 = arith.constant 0 : i32
    return %c0_i32, %c0_i32_0 : i32, i32
  }
  func.func @transform_13(%arg0: i32) -> (i32, i32) {
    %c0_i32 = arith.constant 0 : i32
    %c0_i32_0 = arith.constant 0 : i32
    %c0_i32_1 = arith.constant 0 : i32
    return %c0_i32, %c0_i32_0 : i32, i32
  }
  func.func @transform_14(%arg0: i32) -> (i32, i32, i32) {
    %c0_i32 = arith.constant 0 : i32
    %c0_i32_0 = arith.constant 0 : i32
    %c0_i32_1 = arith.constant 0 : i32
    return %arg0, %c0_i32, %c0_i32_0 : i32, i32, i32
  }
}

</mosaic_0001>

<llo_original>
// kernel: sa_forward.1
$region0: #{sa_forward.1}
  #allocation0 [shape = 'u32[]', space=smem, size = 0x4, offset = 0x4, fixed_abs, tag = 'smem constant byte address 0x4 - core index']
  #allocation1 [shape = 'u32[144,128]{1,0:T(1,128)}', space=vmem, size = 0x12000, scoped, tag = 'internal scratch']
  %s0 = inlined_call_operand.vmem [shape: f32[2,8,32], index: 0, kind: input, shape index: {}]
  %s1 = inlined_call_operand.vmem [shape: f32[2,1,8], index: 1, kind: input, shape index: {}]
  %s2 = inlined_call_operand.vmem [shape: f32[32,96], index: 2, kind: input, shape index: {}]
  %s3 = inlined_call_operand.vmem [shape: f32[1,96], index: 3, kind: input, shape index: {}]
  %s4 = inlined_call_operand.vmem [shape: f32[32,32], index: 4, kind: input, shape index: {}]
  %s5 = inlined_call_operand.vmem [shape: f32[1,32], index: 5, kind: input, shape index: {}]
  %s6 = inlined_call_operand.vmem [shape: f32[32,64], index: 6, kind: input, shape index: {}]
  %s7 = inlined_call_operand.vmem [shape: f32[1,64], index: 7, kind: input, shape index: {}]
  %s8 = inlined_call_operand.vmem [shape: f32[64,32], index: 8, kind: input, shape index: {}]
  %s9 = inlined_call_operand.vmem [shape: f32[1,32], index: 9, kind: input, shape index: {}]
  %s10 = inlined_call_operand.vmem [shape: f32[1,32], index: 10, kind: input, shape index: {}]
  %s11 = inlined_call_operand.vmem [shape: f32[1,32], index: 11, kind: input, shape index: {}]
  %s12 = inlined_call_operand.vmem [shape: f32[1,32], index: 12, kind: input, shape index: {}]
  %s13 = inlined_call_operand.vmem [shape: f32[1,32], index: 13, kind: input, shape index: {}]
  %s14 = inlined_call_operand.hbm [shape: f32[2,8,32], index: 14, kind: output, shape index: {}]
  %s15 = sld [smem:[#allocation0]]
  $region66: #{sa_forward.1} parent=0
    _
  %s17 = ssub.s32 1, %s15
  %s18 = scalar_select 0, %s17, %s15
  $region1: #{sa_forward.1} parent=0
    #allocation2 [shape = 'u8[8192]{0}', space=vmem, size = 0x2000, scoped, tag = 'output window, operand 0, single buffered']
    #allocation3 [shape = 's32[1]{0}', space=sflag, size = 0x4, scoped, tag = 'scoped memory for sa_forward.1']
    %19 = vsyncpa [#allocation3], 0
    // Predicated region
    $region2: #{sa_forward.1} parent=1 // pred_check
      _
    $region3: #{sa_forward.1} parent=1 // pred_check_branch
      %21 = sbr.rel (0) target = $region5
    $region4: #{sa_forward.1} parent=1 // pred_region
      _
    $region5: #{sa_forward.1} parent=1 // pred_fallthru
      _
    // Predicated region
    $region6: #{sa_forward.1} parent=1 // pred_check
      _
    $region7: #{sa_forward.1} parent=1 // pred_check_branch
      %23 = sbr.rel (0) target = $region9
    $region8: #{sa_forward.1} parent=1 // pred_region
      _
    $region9: #{sa_forward.1} parent=1 // pred_fallthru
      _
    // Predicated region
    $region10: #{sa_forward.1} parent=1 // pred_check
      _
    $region11: #{sa_forward.1} parent=1 // pred_check_branch
      %25 = sbr.rel (0) target = $region13
    $region12: #{sa_forward.1} parent=1 // pred_region
      _
    $region13: #{sa_forward.1} parent=1 // pred_fallthru
      _
    // Predicated region
    $region14: #{sa_forward.1} parent=1 // pred_check
      _
    $region15: #{sa_forward.1} parent=1 // pred_check_branch
      %27 = sbr.rel (0) target = $region17
    $region16: #{sa_forward.1} parent=1 // pred_region
      _
    $region17: #{sa_forward.1} parent=1 // pred_fallthru
      _
    // Predicated region
    $region18: #{sa_forward.1} parent=1 // pred_check
      _
    $region19: #{sa_forward.1} parent=1 // pred_check_branch
      %29 = sbr.rel (0) target = $region21
    $region20: #{sa_forward.1} parent=1 // pred_region
      _
    $region21: #{sa_forward.1} parent=1 // pred_fallthru
      _
    // Predicated region
    $region22: #{sa_forward.1} parent=1 // pred_check
      _
    $region23: #{sa_forward.1} parent=1 // pred_check_branch
      %31 = sbr.rel (0) target = $region25
    $region24: #{sa_forward.1} parent=1 // pred_region
      _
    $region25: #{sa_forward.1} parent=1 // pred_fallthru
      _
    // Predicated region
    $region26: #{sa_forward.1} parent=1 // pred_check
      _
    $region27: #{sa_forward.1} parent=1 // pred_check_branch
      %33 = sbr.rel (0) target = $region29
    $region28: #{sa_forward.1} parent=1 // pred_region
      _
    $region29: #{sa_forward.1} parent=1 // pred_fallthru
      _
    // Predicated region
    $region30: #{sa_forward.1} parent=1 // pred_check
      _
    $region31: #{sa_forward.1} parent=1 // pred_check_branch
      %35 = sbr.rel (0) target = $region33
    $region32: #{sa_forward.1} parent=1 // pred_region
      _
    $region33: #{sa_forward.1} parent=1 // pred_fallthru
      _
    // Predicated region
    $region34: #{sa_forward.1} parent=1 // pred_check
      _
    $region35: #{sa_forward.1} parent=1 // pred_check_branch
      %37 = sbr.rel (0) target = $region37
    $region36: #{sa_forward.1} parent=1 // pred_region
      _
    $region37: #{sa_forward.1} parent=1 // pred_fallthru
      _
    // Predicated region
    $region38: #{sa_forward.1} parent=1 // pred_check
      _
    $region39: #{sa_forward.1} parent=1 // pred_check_branch
      %39 = sbr.rel (0) target = $region41
    $region40: #{sa_forward.1} parent=1 // pred_region
      _
    $region41: #{sa_forward.1} parent=1 // pred_fallthru
      _
    // Predicated region
    $region42: #{sa_forward.1} parent=1 // pred_check
      _
    $region43: #{sa_forward.1} parent=1 // pred_check_branch
      %41 = sbr.rel (0) target = $region45
    $region44: #{sa_forward.1} parent=1 // pred_region
      _
    $region45: #{sa_forward.1} parent=1 // pred_fallthru
      _
    // Predicated region
    $region46: #{sa_forward.1} parent=1 // pred_check
      _
    $region47: #{sa_forward.1} parent=1 // pred_check_branch
      %43 = sbr.rel (0) target = $region49
    $region48: #{sa_forward.1} parent=1 // pred_region
      _
    $region49: #{sa_forward.1} parent=1 // pred_fallthru
      _
    // Predicated region
    $region50: #{sa_forward.1} parent=1 // pred_check
      _
    $region51: #{sa_forward.1} parent=1 // pred_check_branch
      %45 = sbr.rel (0) target = $region53
    $region52: #{sa_forward.1} parent=1 // pred_region
      _
    $region53: #{sa_forward.1} parent=1 // pred_fallthru
      _
    // Predicated region
    $region54: #{sa_forward.1} parent=1 // pred_check
      _
    $region55: #{sa_forward.1} parent=1 // pred_check_branch
      %47 = sbr.rel (0) target = $region57
    $region56: #{sa_forward.1} parent=1 // pred_region
      _
    $region57: #{sa_forward.1} parent=1 // pred_fallthru
      _
    %v48 = vld [vmem:[%s0] sm:$0xff]
    %v49 = vld [vmem:[%s0 + $0x8] sm:$0xff]
    %v50 = vld [vmem:[%s1] sm:$0x1]
    %v51 = vld [vmem:[%s1 + $0x1] sm:$0x1]
    %v52 = vld [vmem:[%s2] sm:$0xff]
    %v53 = vld [vmem:[%s2 + $0x8] sm:$0xff]
    %v54 = vld [vmem:[%s2 + $0x10] sm:$0xff]
    %v55 = vld [vmem:[%s2 + $0x18] sm:$0xff]
    %v56 = vld [vmem:[%s3] sm:$0x1]
    %v58 = vlaneseq
    %v59 = vshrl.u32 %v58, 7
    %v60 = vsub.s32 0, %v59
    %v61 = vrot.slane %v56, %v60
    %vm63 = vcmask 261120
    %v65 = vsel %vm63, %v48, 0
    %v68 = vsel %vm63, %v49, 0
    %70 = vmatprep.subr.mxu0 0.0
    %71 = vmatpush1.msra.mxu0 %v52
    %72 = vmatprep.subr.mxu0 0.0
    %73 = vmatpush1.msra.mxu0 %v53
    %74 = vmatprep.subr.mxu0 0.0
    %75 = vmatpush1.msra.mxu0 %v54
    %76 = vmatprep.subr.mxu0 0.0
    %77 = vmatpush1.msra.mxu0 %v55
    %78 = vmatprep.subr.mxu0 0.0
    %79 = vmatpush1.msra.mxu0 0.0
    %80 = vmatprep.subr.mxu0 0.0
    %81 = vmatpush1.msra.mxu0 0.0
    %82 = vmatprep.subr.mxu0 0.0
    %83 = vmatpush1.msra.mxu0 0.0
    %84 = vmatprep.subr.mxu0 0.0
    %85 = vmatpush1.msra.mxu0 0.0
    %86 = vmatprep.subr.mxu0 0.0
    %87 = vmatpush1.msra.mxu0 0.0
    %88 = vmatprep.subr.mxu0 0.0
    %89 = vmatpush1.msra.mxu0 0.0
    %90 = vmatprep.subr.mxu0 0.0
    %91 = vmatpush1.msra.mxu0 0.0
    %92 = vmatprep.subr.mxu0 0.0
    %93 = vmatpush1.msra.mxu0 0.0
    %94 = vmatprep.subr.mxu0 0.0
    %95 = vmatpush1.msra.mxu0 0.0
    %96 = vmatprep.subr.mxu0 0.0
    %97 = vmatpush1.msra.mxu0 0.0
    %98 = vmatprep.subr.mxu0 0.0
    %99 = vmatpush1.msra.mxu0 0.0
    %100 = vmatprep.subr.mxu0 0.0
    %101 = vmatpush1.msra.mxu0 0.0
    %102 = vmatprep.subr.mxu0 0.0
    %103 = vmatpush1.msra.mxu0 0.0
    %104 = vmatprep.subr.mxu0 0.0
    %105 = vmatpush1.msra.mxu0 0.0
    %106 = vmatprep.subr.mxu0 0.0
    %107 = vmatpush1.msra.mxu0 0.0
    %108 = vmatprep.subr.mxu0 0.0
    %109 = vmatpush1.msra.mxu0 0.0
    %110 = vmatprep.subr.mxu0 0.0
    %111 = vmatpush1.msra.mxu0 0.0
    %112 = vmatprep.subr.mxu0 0.0
    %113 = vmatpush1.msra.mxu0 0.0
    %114 = vmatprep.subr.mxu0 0.0
    %115 = vmatpush1.msra.mxu0 0.0
    %116 = vmatprep.subr.mxu0 0.0
    %117 = vmatpush1.msra.mxu0 0.0
    %118 = vmatprep.subr.mxu0 0.0
    %119 = vmatpush1.msra.mxu0 0.0
    %120 = vmatprep.subr.mxu0 0.0
    %121 = vmatpush1.msra.mxu0 0.0
    %122 = vmatprep.subr.mxu0 0.0
    %123 = vmatpush1.msra.mxu0 0.0
    %124 = vmatprep.subr.mxu0 0.0
    %125 = vmatpush1.msra.mxu0 0.0
    %126 = vmatprep.subr.mxu0 0.0
    %127 = vmatpush1.msra.mxu0 0.0
    %128 = vmatprep.subr.mxu0 0.0
    %129 = vmatpush1.msra.mxu0 0.0
    %130 = vmatprep.subr.mxu0 0.0
    %131 = vmatpush1.msra.mxu0 0.0
    %132 = vmatprep.subr.mxu0 0.0
    %133 = vmatpush1.msra.mxu0 0.0
    %134 = vmatprep.mubr.f32.mxu0 0.0
    %135 = vmatmul.mubr.f32.gmra.mrb[0].mxu0 %v65
    %v136 = vpop.f32.mrb[0].mxu0
    %v137 = vadd.f32 %v61, %v136
    %v138 = vpop.f32.mrb[0].mxu0
    %139 = vmatprep.mubr.f32.mxu0 0.0
    %140 = vmatmul.mubr.f32.gmra.mrb[0].mxu0 %v68
    %v141 = vpop.f32.mrb[0].mxu0
    %v142 = vadd.f32 %v61, %v141
    %v143 = vpop.f32.mrb[0].mxu0
    %144 = vdwg.mxu0
    %v145 = vld [vmem:[%s4] sm:$0xff]
    %v146 = vld [vmem:[%s4 + $0x8] sm:$0xff]
    %v147 = vld [vmem:[%s4 + $0x10] sm:$0xff]
    %v148 = vld [vmem:[%s4 + $0x18] sm:$0xff]
    %150 = vrot.lane.b32.xlu0 %v137, 96
    %v151 = vpop.permute.xlu0 %150
    %vm152 = vcmask 64512
    %v153 = vsel %vm152, %v137, 0
    %v155 = vsel %vm152, %v151, 0
    %157 = vmatprep.subr.mxu0 0.0
    %158 = vmatpush1.xpose.msra.mxu0 %v155
    %159 = vmatprep.subr.mxu0 0.0
    %160 = vmatpush1.xpose.msra.mxu0 0.0
    %161 = vmatprep.subr.mxu0 0.0
    %162 = vmatpush1.xpose.msra.mxu0 0.0
    %163 = vmatprep.subr.mxu0 0.0
    %164 = vmatpush1.xpose.msra.mxu0 0.0
    %165 = vmatprep.subr.mxu0 0.0
    %166 = vmatpush1.xpose.msra.mxu0 0.0
    %167 = vmatprep.subr.mxu0 0.0
    %168 = vmatpush1.xpose.msra.mxu0 0.0
    %169 = vmatprep.subr.mxu0 0.0
    %170 = vmatpush1.xpose.msra.mxu0 0.0
    %171 = vmatprep.subr.mxu0 0.0
    %172 = vmatpush1.xpose.msra.mxu0 0.0
    %173 = vmatprep.subr.mxu0 0.0
    %174 = vmatpush1.xpose.msra.mxu0 0.0
    %175 = vmatprep.subr.mxu0 0.0
    %176 = vmatpush1.xpose.msra.mxu0 0.0
    %177 = vmatprep.subr.mxu0 0.0
    %178 = vmatpush1.xpose.msra.mxu0 0.0
    %179 = vmatprep.subr.mxu0 0.0
    %180 = vmatpush1.xpose.msra.mxu0 0.0
    %181 = vmatprep.subr.mxu0 0.0
    %182 = vmatpush1.xpose.msra.mxu0 0.0
    %183 = vmatprep.subr.mxu0 0.0
    %184 = vmatpush1.xpose.msra.mxu0 0.0
    %185 = vmatprep.subr.mxu0 0.0
    %186 = vmatpush1.xpose.msra.mxu0 0.0
    %187 = vmatprep.subr.mxu0 0.0
    %188 = vmatpush1.xpose.msra.mxu0 0.0
    %189 = vmatprep.subr.mxu0 0.0
    %190 = vmatpush1.xpose.msra.mxu0 0.0
    %191 = vmatprep.subr.mxu0 0.0
    %192 = vmatpush1.xpose.msra.mxu0 0.0
    %193 = vmatprep.subr.mxu0 0.0
    %194 = vmatpush1.xpose.msra.mxu0 0.0
    %195 = vmatprep.subr.mxu0 0.0
    %196 = vmatpush1.xpose.msra.mxu0 0.0
    %197 = vmatprep.subr.mxu0 0.0
    %198 = vmatpush1.xpose.msra.mxu0 0.0
    %199 = vmatprep.subr.mxu0 0.0
    %200 = vmatpush1.xpose.msra.mxu0 0.0
    %201 = vmatprep.subr.mxu0 0.0
    %202 = vmatpush1.xpose.msra.mxu0 0.0
    %203 = vmatprep.subr.mxu0 0.0
    %204 = vmatpush1.xpose.msra.mxu0 0.0
    %205 = vmatprep.subr.mxu0 0.0
    %206 = vmatpush1.xpose.msra.mxu0 0.0
    %207 = vmatprep.subr.mxu0 0.0
    %208 = vmatpush1.xpose.msra.mxu0 0.0
    %209 = vmatprep.subr.mxu0 0.0
    %210 = vmatpush1.xpose.msra.mxu0 0.0
    %211 = vmatprep.subr.mxu0 0.0
    %212 = vmatpush1.xpose.msra.mxu0 0.0
    %213 = vmatprep.subr.mxu0 0.0
    %214 = vmatpush1.xpose.msra.mxu0 0.0
    %215 = vmatprep.subr.mxu0 0.0
    %216 = vmatpush1.xpose.msra.mxu0 0.0
    %217 = vmatprep.subr.mxu0 0.0
    %218 = vmatpush1.xpose.msra.mxu0 0.0
    %219 = vmatprep.subr.mxu0 0.0
    %220 = vmatpush1.xpose.msra.mxu0 0.0
    %221 = vmatprep.mubr.f32.mxu0 0.0
    %222 = vmatmul.mubr.f32.gmra.mrb[0].mxu0 %v153
    %v223 = vpop.f32.mrb[0].mxu0
    %v224 = vadd.f32 0.0, %v223
    %v225 = vpop.f32.mrb[0].mxu0
    %226 = vdwg.mxu0
    %228 = vrot.lane.b32.xlu0 %v142, 96
    %v229 = vpop.permute.xlu0 %228
    %v230 = vsel %vm152, %v142, 0
    %v232 = vsel %vm152, %v229, 0
    %234 = vmatprep.subr.mxu0 0.0
    %235 = vmatpush1.xpose.msra.mxu0 %v232
    %236 = vmatprep.subr.mxu0 0.0
    %237 = vmatpush1.xpose.msra.mxu0 0.0
    %238 = vmatprep.subr.mxu0 0.0
    %239 = vmatpush1.xpose.msra.mxu0 0.0
    %240 = vmatprep.subr.mxu0 0.0
    %241 = vmatpush1.xpose.msra.mxu0 0.0
    %242 = vmatprep.subr.mxu0 0.0
    %243 = vmatpush1.xpose.msra.mxu0 0.0
    %244 = vmatprep.subr.mxu0 0.0
    %245 = vmatpush1.xpose.msra.mxu0 0.0
    %246 = vmatprep.subr.mxu0 0.0
    %247 = vmatpush1.xpose.msra.mxu0 0.0
    %248 = vmatprep.subr.mxu0 0.0
    %249 = vmatpush1.xpose.msra.mxu0 0.0
    %250 = vmatprep.subr.mxu0 0.0
    %251 = vmatpush1.xpose.msra.mxu0 0.0
    %252 = vmatprep.subr.mxu0 0.0
    %253 = vmatpush1.xpose.msra.mxu0 0.0
    %254 = vmatprep.subr.mxu0 0.0
    %255 = vmatpush1.xpose.msra.mxu0 0.0
    %256 = vmatprep.subr.mxu0 0.0
    %257 = vmatpush1.xpose.msra.mxu0 0.0
    %258 = vmatprep.subr.mxu0 0.0
    %259 = vmatpush1.xpose.msra.mxu0 0.0
    %260 = vmatprep.subr.mxu0 0.0
    %261 = vmatpush1.xpose.msra.mxu0 0.0
    %262 = vmatprep.subr.mxu0 0.0
    %263 = vmatpush1.xpose.msra.mxu0 0.0
    %264 = vmatprep.subr.mxu0 0.0
    %265 = vmatpush1.xpose.msra.mxu0 0.0
    %266 = vmatprep.subr.mxu0 0.0
    %267 = vmatpush1.xpose.msra.mxu0 0.0
    %268 = vmatprep.subr.mxu0 0.0
    %269 = vmatpush1.xpose.msra.mxu0 0.0
    %270 = vmatprep.subr.mxu0 0.0
    %271 = vmatpush1.xpose.msra.mxu0 0.0
    %272 = vmatprep.subr.mxu0 0.0
    %273 = vmatpush1.xpose.msra.mxu0 0.0
    %274 = vmatprep.subr.mxu0 0.0
    %275 = vmatpush1.xpose.msra.mxu0 0.0
    %276 = vmatprep.subr.mxu0 0.0
    %277 = vmatpush1.xpose.msra.mxu0 0.0
    %278 = vmatprep.subr.mxu0 0.0
    %279 = vmatpush1.xpose.msra.mxu0 0.0
    %280 = vmatprep.subr.mxu0 0.0
    %281 = vmatpush1.xpose.msra.mxu0 0.0
    %282 = vmatprep.subr.mxu0 0.0
    %283 = vmatpush1.xpose.msra.mxu0 0.0
    %284 = vmatprep.subr.mxu0 0.0
    %285 = vmatpush1.xpose.msra.mxu0 0.0
    %286 = vmatprep.subr.mxu0 0.0
    %287 = vmatpush1.xpose.msra.mxu0 0.0
    %288 = vmatprep.subr.mxu0 0.0
    %289 = vmatpush1.xpose.msra.mxu0 0.0
    %290 = vmatprep.subr.mxu0 0.0
    %291 = vmatpush1.xpose.msra.mxu0 0.0
    %292 = vmatprep.subr.mxu0 0.0
    %293 = vmatpush1.xpose.msra.mxu0 0.0
    %294 = vmatprep.subr.mxu0 0.0
    %295 = vmatpush1.xpose.msra.mxu0 0.0
    %296 = vmatprep.subr.mxu0 0.0
    %297 = vmatpush1.xpose.msra.mxu0 0.0
    %298 = vmatprep.mubr.f32.mxu0 0.0
    %299 = vmatmul.mubr.f32.gmra.mrb[0].mxu0 %v230
    %v300 = vpop.f32.mrb[0].mxu0
    %v301 = vadd.f32 0.0, %v300
    %v302 = vpop.f32.mrb[0].mxu0
    %303 = vdwg.mxu0
    %v304 = vmul.f32 %v224, 0.35355338
    %v305 = vmul.f32 %v301, 0.35355338
    %v308 = vlaneseq
    %v309 = vshrl.u32 %v308, 7
    %v310 = vsub.s32 0, %v309
    %v311 = vrot.slane %v50, %v310
    %v312 = vlaneseq
    %v313 = vshrl.u32 %v312, 7
    %v314 = vsub.s32 0, %v313
    %v315 = vrot.slane %v51, %v314
    %v318 = vadd.f32 %v304, %v311
    %v319 = vadd.f32 %v305, %v315
    %v320 = vsel %vm152, %v318, -inf
    %321 = vmax.xlane.f32.xlu0 %v320
    %v322 = vpop.xlane.xlu0 %321
    %v323 = vsel %vm152, %v319, -inf
    %324 = vmax.xlane.f32.xlu0 %v323
    %v325 = vpop.xlane.xlu0 %324
    %v326 = vsub.f32 %v318, %v322
    %v327 = vsub.f32 %v319, %v325
    %v328 = vmul.f32 %v326, 1.442695
    %v329 = vpow.pop %v328
    %v330 = vmul.f32 %v327, 1.442695
    %v331 = vpow.pop %v330
    %v332 = vsel %vm152, %v329, 0.0
    %333 = vadd.xlane.f32.xlu0 %v332
    %v334 = vpop.xlane.xlu0 %333
    %v335 = vsel %vm152, %v331, 0.0
    %336 = vadd.xlane.f32.xlu0 %v335
    %v337 = vpop.xlane.xlu0 %336
    %v338 = vrcp.pop %v334
    %v339 = vrcp.pop %v337
    %v340 = vmul.f32 %v329, %v338
    %v341 = vmul.f32 %v331, %v339
    %342 = vrot.lane.b32.xlu0 %v137, 64
    %v343 = vpop.permute.xlu0 %342
    %v346 = vsel %vm152, %v340, 0
    %348 = vmatprep.subr.mxu0 0.0
    %349 = vmatpush1.msra.mxu0 %v343
    %350 = vmatprep.subr.mxu0 0.0
    %351 = vmatpush1.msra.mxu0 0.0
    %352 = vmatprep.subr.mxu0 0.0
    %353 = vmatpush1.msra.mxu0 0.0
    %354 = vmatprep.subr.mxu0 0.0
    %355 = vmatpush1.msra.mxu0 0.0
    %356 = vmatprep.subr.mxu0 0.0
    %357 = vmatpush1.msra.mxu0 0.0
    %358 = vmatprep.subr.mxu0 0.0
    %359 = vmatpush1.msra.mxu0 0.0
    %360 = vmatprep.subr.mxu0 0.0
    %361 = vmatpush1.msra.mxu0 0.0
    %362 = vmatprep.subr.mxu0 0.0
    %363 = vmatpush1.msra.mxu0 0.0
    %364 = vmatprep.subr.mxu0 0.0
    %365 = vmatpush1.msra.mxu0 0.0
    %366 = vmatprep.subr.mxu0 0.0
    %367 = vmatpush1.msra.mxu0 0.0
    %368 = vmatprep.subr.mxu0 0.0
    %369 = vmatpush1.msra.mxu0 0.0
    %370 = vmatprep.subr.mxu0 0.0
    %371 = vmatpush1.msra.mxu0 0.0
    %372 = vmatprep.subr.mxu0 0.0
    %373 = vmatpush1.msra.mxu0 0.0
    %374 = vmatprep.subr.mxu0 0.0
    %375 = vmatpush1.msra.mxu0 0.0
    %376 = vmatprep.subr.mxu0 0.0
    %377 = vmatpush1.msra.mxu0 0.0
    %378 = vmatprep.subr.mxu0 0.0
    %379 = vmatpush1.msra.mxu0 0.0
    %380 = vmatprep.subr.mxu0 0.0
    %381 = vmatpush1.msra.mxu0 0.0
    %382 = vmatprep.subr.mxu0 0.0
    %383 = vmatpush1.msra.mxu0 0.0
    %384 = vmatprep.subr.mxu0 0.0
    %385 = vmatpush1.msra.mxu0 0.0
    %386 = vmatprep.subr.mxu0 0.0
    %387 = vmatpush1.msra.mxu0 0.0
    %388 = vmatprep.subr.mxu0 0.0
    %389 = vmatpush1.msra.mxu0 0.0
    %390 = vmatprep.subr.mxu0 0.0
    %391 = vmatpush1.msra.mxu0 0.0
    %392 = vmatprep.subr.mxu0 0.0
    %393 = vmatpush1.msra.mxu0 0.0
    %394 = vmatprep.subr.mxu0 0.0
    %395 = vmatpush1.msra.mxu0 0.0
    %396 = vmatprep.subr.mxu0 0.0
    %397 = vmatpush1.msra.mxu0 0.0
    %398 = vmatprep.subr.mxu0 0.0
    %399 = vmatpush1.msra.mxu0 0.0
    %400 = vmatprep.subr.mxu0 0.0
    %401 = vmatpush1.msra.mxu0 0.0
    %402 = vmatprep.subr.mxu0 0.0
    %403 = vmatpush1.msra.mxu0 0.0
    %404 = vmatprep.subr.mxu0 0.0
    %405 = vmatpush1.msra.mxu0 0.0
    %406 = vmatprep.subr.mxu0 0.0
    %407 = vmatpush1.msra.mxu0 0.0
    %408 = vmatprep.subr.mxu0 0.0
    %409 = vmatpush1.msra.mxu0 0.0
    %410 = vmatprep.subr.mxu0 0.0
    %411 = vmatpush1.msra.mxu0 0.0
    %412 = vmatprep.mubr.f32.mxu0 0.0
    %413 = vmatmul.mubr.f32.gmra.mrb[0].mxu0 %v346
    %v414 = vpop.f32.mrb[0].mxu0
    %v415 = vadd.f32 0.0, %v414
    %v416 = vpop.f32.mrb[0].mxu0
    %417 = vdwg.mxu0
    %418 = vrot.lane.b32.xlu0 %v142, 64
    %v419 = vpop.permute.xlu0 %418
    %v422 = vsel %vm152, %v341, 0
    %424 = vmatprep.subr.mxu0 0.0
    %425 = vmatpush1.msra.mxu0 %v419
    %426 = vmatprep.subr.mxu0 0.0
    %427 = vmatpush1.msra.mxu0 0.0
    %428 = vmatprep.subr.mxu0 0.0
    %429 = vmatpush1.msra.mxu0 0.0
    %430 = vmatprep.subr.mxu0 0.0
    %431 = vmatpush1.msra.mxu0 0.0
    %432 = vmatprep.subr.mxu0 0.0
    %433 = vmatpush1.msra.mxu0 0.0
    %434 = vmatprep.subr.mxu0 0.0
    %435 = vmatpush1.msra.mxu0 0.0
    %436 = vmatprep.subr.mxu0 0.0
    %437 = vmatpush1.msra.mxu0 0.0
    %438 = vmatprep.subr.mxu0 0.0
    %439 = vmatpush1.msra.mxu0 0.0
    %440 = vmatprep.subr.mxu0 0.0
    %441 = vmatpush1.msra.mxu0 0.0
    %442 = vmatprep.subr.mxu0 0.0
    %443 = vmatpush1.msra.mxu0 0.0
    %444 = vmatprep.subr.mxu0 0.0
    %445 = vmatpush1.msra.mxu0 0.0
    %446 = vmatprep.subr.mxu0 0.0
    %447 = vmatpush1.msra.mxu0 0.0
    %448 = vmatprep.subr.mxu0 0.0
    %449 = vmatpush1.msra.mxu0 0.0
    %450 = vmatprep.subr.mxu0 0.0
    %451 = vmatpush1.msra.mxu0 0.0
    %452 = vmatprep.subr.mxu0 0.0
    %453 = vmatpush1.msra.mxu0 0.0
    %454 = vmatprep.subr.mxu0 0.0
    %455 = vmatpush1.msra.mxu0 0.0
    %456 = vmatprep.subr.mxu0 0.0
    %457 = vmatpush1.msra.mxu0 0.0
    %458 = vmatprep.subr.mxu0 0.0
    %459 = vmatpush1.msra.mxu0 0.0
    %460 = vmatprep.subr.mxu0 0.0
    %461 = vmatpush1.msra.mxu0 0.0
    %462 = vmatprep.subr.mxu0 0.0
    %463 = vmatpush1.msra.mxu0 0.0
    %464 = vmatprep.subr.mxu0 0.0
    %465 = vmatpush1.msra.mxu0 0.0
    %466 = vmatprep.subr.mxu0 0.0
    %467 = vmatpush1.msra.mxu0 0.0
    %468 = vmatprep.subr.mxu0 0.0
    %469 = vmatpush1.msra.mxu0 0.0
    %470 = vmatprep.subr.mxu0 0.0
    %471 = vmatpush1.msra.mxu0 0.0
    %472 = vmatprep.subr.mxu0 0.0
    %473 = vmatpush1.msra.mxu0 0.0
    %474 = vmatprep.subr.mxu0 0.0
    %475 = vmatpush1.msra.mxu0 0.0
    %476 = vmatprep.subr.mxu0 0.0
    %477 = vmatpush1.msra.mxu0 0.0
    %478 = vmatprep.subr.mxu0 0.0
    %479 = vmatpush1.msra.mxu0 0.0
    %480 = vmatprep.subr.mxu0 0.0
    %481 = vmatpush1.msra.mxu0 0.0
    %482 = vmatprep.subr.mxu0 0.0
    %483 = vmatpush1.msra.mxu0 0.0
    %484 = vmatprep.subr.mxu0 0.0
    %485 = vmatpush1.msra.mxu0 0.0
    %486 = vmatprep.subr.mxu0 0.0
    %487 = vmatpush1.msra.mxu0 0.0
    %488 = vmatprep.mubr.f32.mxu0 0.0
    %489 = vmatmul.mubr.f32.gmra.mrb[0].mxu0 %v422
    %v490 = vpop.f32.mrb[0].mxu0
    %v491 = vadd.f32 0.0, %v490
    %v492 = vpop.f32.mrb[0].mxu0
    %493 = vdwg.mxu0
    %494 = vrot.lane.b32.xlu0 %v137, 120
    %v495 = vpop.permute.xlu0 %494
    %496 = vrot.lane.b32.xlu0 %v137, 88
    %v497 = vpop.permute.xlu0 %496
    %v498 = vsel %vm152, %v495, 0
    %v500 = vsel %vm152, %v497, 0
    %502 = vmatprep.subr.mxu0 0.0
    %503 = vmatpush1.xpose.msra.mxu0 %v500
    %504 = vmatprep.subr.mxu0 0.0
    %505 = vmatpush1.xpose.msra.mxu0 0.0
    %506 = vmatprep.subr.mxu0 0.0
    %507 = vmatpush1.xpose.msra.mxu0 0.0
    %508 = vmatprep.subr.mxu0 0.0
    %509 = vmatpush1.xpose.msra.mxu0 0.0
    %510 = vmatprep.subr.mxu0 0.0
    %511 = vmatpush1.xpose.msra.mxu0 0.0
    %512 = vmatprep.subr.mxu0 0.0
    %513 = vmatpush1.xpose.msra.mxu0 0.0
    %514 = vmatprep.subr.mxu0 0.0
    %515 = vmatpush1.xpose.msra.mxu0 0.0
    %516 = vmatprep.subr.mxu0 0.0
    %517 = vmatpush1.xpose.msra.mxu0 0.0
    %518 = vmatprep.subr.mxu0 0.0
    %519 = vmatpush1.xpose.msra.mxu0 0.0
    %520 = vmatprep.subr.mxu0 0.0
    %521 = vmatpush1.xpose.msra.mxu0 0.0
    %522 = vmatprep.subr.mxu0 0.0
    %523 = vmatpush1.xpose.msra.mxu0 0.0
    %524 = vmatprep.subr.mxu0 0.0
    %525 = vmatpush1.xpose.msra.mxu0 0.0
    %526 = vmatprep.subr.mxu0 0.0
    %527 = vmatpush1.xpose.msra.mxu0 0.0
    %528 = vmatprep.subr.mxu0 0.0
    %529 = vmatpush1.xpose.msra.mxu0 0.0
    %530 = vmatprep.subr.mxu0 0.0
    %531 = vmatpush1.xpose.msra.mxu0 0.0
    %532 = vmatprep.subr.mxu0 0.0
    %533 = vmatpush1.xpose.msra.mxu0 0.0
    %534 = vmatprep.subr.mxu0 0.0
    %535 = vmatpush1.xpose.msra.mxu0 0.0
    %536 = vmatprep.subr.mxu0 0.0
    %537 = vmatpush1.xpose.msra.mxu0 0.0
    %538 = vmatprep.subr.mxu0 0.0
    %539 = vmatpush1.xpose.msra.mxu0 0.0
    %540 = vmatprep.subr.mxu0 0.0
    %541 = vmatpush1.xpose.msra.mxu0 0.0
    %542 = vmatprep.subr.mxu0 0.0
    %543 = vmatpush1.xpose.msra.mxu0 0.0
    %544 = vmatprep.subr.mxu0 0.0
    %545 = vmatpush1.xpose.msra.mxu0 0.0
    %546 = vmatprep.subr.mxu0 0.0
    %547 = vmatpush1.xpose.msra.mxu0 0.0
    %548 = vmatprep.subr.mxu0 0.0
    %549 = vmatpush1.xpose.msra.mxu0 0.0
    %550 = vmatprep.subr.mxu0 0.0
    %551 = vmatpush1.xpose.msra.mxu0 0.0
    %552 = vmatprep.subr.mxu0 0.0
    %553 = vmatpush1.xpose.msra.mxu0 0.0
    %554 = vmatprep.subr.mxu0 0.0
    %555 = vmatpush1.xpose.msra.mxu0 0.0
    %556 = vmatprep.subr.mxu0 0.0
    %557 = vmatpush1.xpose.msra.mxu0 0.0
    %558 = vmatprep.subr.mxu0 0.0
    %559 = vmatpush1.xpose.msra.mxu0 0.0
    %560 = vmatprep.subr.mxu0 0.0
    %561 = vmatpush1.xpose.msra.mxu0 0.0
    %562 = vmatprep.subr.mxu0 0.0
    %563 = vmatpush1.xpose.msra.mxu0 0.0
    %564 = vmatprep.subr.mxu0 0.0
    %565 = vmatpush1.xpose.msra.mxu0 0.0
    %566 = vmatprep.mubr.f32.mxu0 0.0
    %567 = vmatmul.mubr.f32.gmra.mrb[0].mxu0 %v498
    %v568 = vpop.f32.mrb[0].mxu0
    %v569 = vadd.f32 0.0, %v568
    %v570 = vpop.f32.mrb[0].mxu0
    %571 = vdwg.mxu0
    %572 = vrot.lane.b32.xlu0 %v142, 120
    %v573 = vpop.permute.xlu0 %572
    %574 = vrot.lane.b32.xlu0 %v142, 88
    %v575 = vpop.permute.xlu0 %574
    %v576 = vsel %vm152, %v573, 0
    %v578 = vsel %vm152, %v575, 0
    %580 = vmatprep.subr.mxu0 0.0
    %581 = vmatpush1.xpose.msra.mxu0 %v578
    %582 = vmatprep.subr.mxu0 0.0
    %583 = vmatpush1.xpose.msra.mxu0 0.0
    %584 = vmatprep.subr.mxu0 0.0
    %585 = vmatpush1.xpose.msra.mxu0 0.0
    %586 = vmatprep.subr.mxu0 0.0
    %587 = vmatpush1.xpose.msra.mxu0 0.0
    %588 = vmatprep.subr.mxu0 0.0
    %589 = vmatpush1.xpose.msra.mxu0 0.0
    %590 = vmatprep.subr.mxu0 0.0
    %591 = vmatpush1.xpose.msra.mxu0 0.0
    %592 = vmatprep.subr.mxu0 0.0
    %593 = vmatpush1.xpose.msra.mxu0 0.0
    %594 = vmatprep.subr.mxu0 0.0
    %595 = vmatpush1.xpose.msra.mxu0 0.0
    %596 = vmatprep.subr.mxu0 0.0
    %597 = vmatpush1.xpose.msra.mxu0 0.0
    %598 = vmatprep.subr.mxu0 0.0
    %599 = vmatpush1.xpose.msra.mxu0 0.0
    %600 = vmatprep.subr.mxu0 0.0
    %601 = vmatpush1.xpose.msra.mxu0 0.0
    %602 = vmatprep.subr.mxu0 0.0
    %603 = vmatpush1.xpose.msra.mxu0 0.0
    %604 = vmatprep.subr.mxu0 0.0
    %605 = vmatpush1.xpose.msra.mxu0 0.0
    %606 = vmatprep.subr.mxu0 0.0
    %607 = vmatpush1.xpose.msra.mxu0 0.0
    %608 = vmatprep.subr.mxu0 0.0
    %609 = vmatpush1.xpose.msra.mxu0 0.0
    %610 = vmatprep.subr.mxu0 0.0
    %611 = vmatpush1.xpose.msra.mxu0 0.0
    %612 = vmatprep.subr.mxu0 0.0
    %613 = vmatpush1.xpose.msra.mxu0 0.0
    %614 = vmatprep.subr.mxu0 0.0
    %615 = vmatpush1.xpose.msra.mxu0 0.0
    %616 = vmatprep.subr.mxu0 0.0
    %617 = vmatpush1.xpose.msra.mxu0 0.0
    %618 = vmatprep.subr.mxu0 0.0
    %619 = vmatpush1.xpose.msra.mxu0 0.0
    %620 = vmatprep.subr.mxu0 0.0
    %621 = vmatpush1.xpose.msra.mxu0 0.0
    %622 = vmatprep.subr.mxu0 0.0
    %623 = vmatpush1.xpose.msra.mxu0 0.0
    %624 = vmatprep.subr.mxu0 0.0
    %625 = vmatpush1.xpose.msra.mxu0 0.0
    %626 = vmatprep.subr.mxu0 0.0
    %627 = vmatpush1.xpose.msra.mxu0 0.0
    %628 = vmatprep.subr.mxu0 0.0
    %629 = vmatpush1.xpose.msra.mxu0 0.0
    %630 = vmatprep.subr.mxu0 0.0
    %631 = vmatpush1.xpose.msra.mxu0 0.0
    %632 = vmatprep.subr.mxu0 0.0
    %633 = vmatpush1.xpose.msra.mxu0 0.0
    %634 = vmatprep.subr.mxu0 0.0
    %635 = vmatpush1.xpose.msra.mxu0 0.0
    %636 = vmatprep.subr.mxu0 0.0
    %637 = vmatpush1.xpose.msra.mxu0 0.0
    %638 = vmatprep.subr.mxu0 0.0
    %639 = vmatpush1.xpose.msra.mxu0 0.0
    %640 = vmatprep.subr.mxu0 0.0
    %641 = vmatpush1.xpose.msra.mxu0 0.0
    %642 = vmatprep.subr.mxu0 0.0
    %643 = vmatpush1.xpose.msra.mxu0 0.0
    %644 = vmatprep.mubr.f32.mxu0 0.0
    %645 = vmatmul.mubr.f32.gmra.mrb[0].mxu0 %v576
    %v646 = vpop.f32.mrb[0].mxu0
    %v647 = vadd.f32 0.0, %v646
    %v648 = vpop.f32.mrb[0].mxu0
    %649 = vdwg.mxu0
    %v650 = vmul.f32 %v569, 0.35355338
    %v651 = vmul.f32 %v647, 0.35355338
    %v652 = vadd.f32 %v650, %v311
    %v653 = vadd.f32 %v651, %v315
    %v654 = vsel %vm152, %v652, -inf
    %655 = vmax.xlane.f32.xlu0 %v654
    %v656 = vpop.xlane.xlu0 %655
    %v657 = vsel %vm152, %v653, -inf
    %658 = vmax.xlane.f32.xlu0 %v657
    %v659 = vpop.xlane.xlu0 %658
    %v660 = vsub.f32 %v652, %v656
    %v661 = vsub.f32 %v653, %v659
    %v662 = vmul.f32 %v660, 1.442695
    %v663 = vpow.pop %v662
    %v664 = vmul.f32 %v661, 1.442695
    %v665 = vpow.pop %v664
    %v666 = vsel %vm152, %v663, 0.0
    %667 = vadd.xlane.f32.xlu0 %v666
    %v668 = vpop.xlane.xlu0 %667
    %v669 = vsel %vm152, %v665, 0.0
    %670 = vadd.xlane.f32.xlu0 %v669
    %v671 = vpop.xlane.xlu0 %670
    %v672 = vrcp.pop %v668
    %v673 = vrcp.pop %v671
    %v674 = vmul.f32 %v663, %v672
    %v675 = vmul.f32 %v665, %v673
    %676 = vrot.lane.b32.xlu0 %v137, 56
    %v677 = vpop.permute.xlu0 %676
    %v680 = vsel %vm152, %v674, 0
    %682 = vmatprep.subr.mxu0 0.0
    %683 = vmatpush1.msra.mxu0 %v677
    %684 = vmatprep.subr.mxu0 0.0
    %685 = vmatpush1.msra.mxu0 0.0
    %686 = vmatprep.subr.mxu0 0.0
    %687 = vmatpush1.msra.mxu0 0.0
    %688 = vmatprep.subr.mxu0 0.0
    %689 = vmatpush1.msra.mxu0 0.0
    %690 = vmatprep.subr.mxu0 0.0
    %691 = vmatpush1.msra.mxu0 0.0
    %692 = vmatprep.subr.mxu0 0.0
    %693 = vmatpush1.msra.mxu0 0.0
    %694 = vmatprep.subr.mxu0 0.0
    %695 = vmatpush1.msra.mxu0 0.0
    %696 = vmatprep.subr.mxu0 0.0
    %697 = vmatpush1.msra.mxu0 0.0
    %698 = vmatprep.subr.mxu0 0.0
    %699 = vmatpush1.msra.mxu0 0.0
    %700 = vmatprep.subr.mxu0 0.0
    %701 = vmatpush1.msra.mxu0 0.0
    %702 = vmatprep.subr.mxu0 0.0
    %703 = vmatpush1.msra.mxu0 0.0
    %704 = vmatprep.subr.mxu0 0.0
    %705 = vmatpush1.msra.mxu0 0.0
    %706 = vmatprep.subr.mxu0 0.0
    %707 = vmatpush1.msra.mxu0 0.0
    %708 = vmatprep.subr.mxu0 0.0
    %709 = vmatpush1.msra.mxu0 0.0
    %710 = vmatprep.subr.mxu0 0.0
    %711 = vmatpush1.msra.mxu0 0.0
    %712 = vmatprep.subr.mxu0 0.0
    %713 = vmatpush1.msra.mxu0 0.0
    %714 = vmatprep.subr.mxu0 0.0
    %715 = vmatpush1.msra.mxu0 0.0
    %716 = vmatprep.subr.mxu0 0.0
    %717 = vmatpush1.msra.mxu0 0.0
    %718 = vmatprep.subr.mxu0 0.0
    %719 = vmatpush1.msra.mxu0 0.0
    %720 = vmatprep.subr.mxu0 0.0
    %721 = vmatpush1.msra.mxu0 0.0
    %722 = vmatprep.subr.mxu0 0.0
    %723 = vmatpush1.msra.mxu0 0.0
    %724 = vmatprep.subr.mxu0 0.0
    %725 = vmatpush1.msra.mxu0 0.0
    %726 = vmatprep.subr.mxu0 0.0
    %727 = vmatpush1.msra.mxu0 0.0
    %728 = vmatprep.subr.mxu0 0.0
    %729 = vmatpush1.msra.mxu0 0.0
    %730 = vmatprep.subr.mxu0 0.0
    %731 = vmatpush1.msra.mxu0 0.0
    %732 = vmatprep.subr.mxu0 0.0
    %733 = vmatpush1.msra.mxu0 0.0
    %734 = vmatprep.subr.mxu0 0.0
    %735 = vmatpush1.msra.mxu0 0.0
    %736 = vmatprep.subr.mxu0 0.0
    %737 = vmatpush1.msra.mxu0 0.0
    %738 = vmatprep.subr.mxu0 0.0
    %739 = vmatpush1.msra.mxu0 0.0
    %740 = vmatprep.subr.mxu0 0.0
    %741 = vmatpush1.msra.mxu0 0.0
    %742 = vmatprep.subr.mxu0 0.0
    %743 = vmatpush1.msra.mxu0 0.0
    %744 = vmatprep.subr.mxu0 0.0
    %745 = vmatpush1.msra.mxu0 0.0
    %746 = vmatprep.mubr.f32.mxu0 0.0
    %747 = vmatmul.mubr.f32.gmra.mrb[0].mxu0 %v680
    %v748 = vpop.f32.mrb[0].mxu0
    %v749 = vadd.f32 0.0, %v748
    %v750 = vpop.f32.mrb[0].mxu0
    %751 = vdwg.mxu0
    %752 = vrot.lane.b32.xlu0 %v142, 56
    %v753 = vpop.permute.xlu0 %752
    %v756 = vsel %vm152, %v675, 0
    %758 = vmatprep.subr.mxu0 0.0
    %759 = vmatpush1.msra.mxu0 %v753
    %760 = vmatprep.subr.mxu0 0.0
    %761 = vmatpush1.msra.mxu0 0.0
    %762 = vmatprep.subr.mxu0 0.0
    %763 = vmatpush1.msra.mxu0 0.0
    %764 = vmatprep.subr.mxu0 0.0
    %765 = vmatpush1.msra.mxu0 0.0
    %766 = vmatprep.subr.mxu0 0.0
    %767 = vmatpush1.msra.mxu0 0.0
    %768 = vmatprep.subr.mxu0 0.0
    %769 = vmatpush1.msra.mxu0 0.0
    %770 = vmatprep.subr.mxu0 0.0
    %771 = vmatpush1.msra.mxu0 0.0
    %772 = vmatprep.subr.mxu0 0.0
    %773 = vmatpush1.msra.mxu0 0.0
    %774 = vmatprep.subr.mxu0 0.0
    %775 = vmatpush1.msra.mxu0 0.0
    %776 = vmatprep.subr.mxu0 0.0
    %777 = vmatpush1.msra.mxu0 0.0
    %778 = vmatprep.subr.mxu0 0.0
    %779 = vmatpush1.msra.mxu0 0.0
    %780 = vmatprep.subr.mxu0 0.0
    %781 = vmatpush1.msra.mxu0 0.0
    %782 = vmatprep.subr.mxu0 0.0
    %783 = vmatpush1.msra.mxu0 0.0
    %784 = vmatprep.subr.mxu0 0.0
    %785 = vmatpush1.msra.mxu0 0.0
    %786 = vmatprep.subr.mxu0 0.0
    %787 = vmatpush1.msra.mxu0 0.0
    %788 = vmatprep.subr.mxu0 0.0
    %789 = vmatpush1.msra.mxu0 0.0
    %790 = vmatprep.subr.mxu0 0.0
    %791 = vmatpush1.msra.mxu0 0.0
    %792 = vmatprep.subr.mxu0 0.0
    %793 = vmatpush1.msra.mxu0 0.0
    %794 = vmatprep.subr.mxu0 0.0
    %795 = vmatpush1.msra.mxu0 0.0
    %796 = vmatprep.subr.mxu0 0.0
    %797 = vmatpush1.msra.mxu0 0.0
    %798 = vmatprep.subr.mxu0 0.0
    %799 = vmatpush1.msra.mxu0 0.0
    %800 = vmatprep.subr.mxu0 0.0
    %801 = vmatpush1.msra.mxu0 0.0
    %802 = vmatprep.subr.mxu0 0.0
    %803 = vmatpush1.msra.mxu0 0.0
    %804 = vmatprep.subr.mxu0 0.0
    %805 = vmatpush1.msra.mxu0 0.0
    %806 = vmatprep.subr.mxu0 0.0
    %807 = vmatpush1.msra.mxu0 0.0
    %808 = vmatprep.subr.mxu0 0.0
    %809 = vmatpush1.msra.mxu0 0.0
    %810 = vmatprep.subr.mxu0 0.0
    %811 = vmatpush1.msra.mxu0 0.0
    %812 = vmatprep.subr.mxu0 0.0
    %813 = vmatpush1.msra.mxu0 0.0
    %814 = vmatprep.subr.mxu0 0.0
    %815 = vmatpush1.msra.mxu0 0.0
    %816 = vmatprep.subr.mxu0 0.0
    %817 = vmatpush1.msra.mxu0 0.0
    %818 = vmatprep.subr.mxu0 0.0
    %819 = vmatpush1.msra.mxu0 0.0
    %820 = vmatprep.subr.mxu0 0.0
    %821 = vmatpush1.msra.mxu0 0.0
    %822 = vmatprep.mubr.f32.mxu0 0.0
    %823 = vmatmul.mubr.f32.gmra.mrb[0].mxu0 %v756
    %v824 = vpop.f32.mrb[0].mxu0
    %v825 = vadd.f32 0.0, %v824
    %v826 = vpop.f32.mrb[0].mxu0
    %827 = vdwg.mxu0
    %v829 = vsel %vm152, %v749, 0
    %v832 = vsel %vm152, %v825, 0
    %834 = vmatprep.subr.mxu0 0.0
    %835 = vmatpush1.msra.mxu0 %v146
    %836 = vmatprep.subr.mxu0 0.0
    %837 = vmatpush1.msra.mxu0 0.0
    %838 = vmatprep.subr.mxu0 0.0
    %839 = vmatpush1.msra.mxu0 0.0
    %840 = vmatprep.subr.mxu0 0.0
    %841 = vmatpush1.msra.mxu0 0.0
    %842 = vmatprep.subr.mxu0 0.0
    %843 = vmatpush1.msra.mxu0 0.0
    %844 = vmatprep.subr.mxu0 0.0
    %845 = vmatpush1.msra.mxu0 0.0
    %846 = vmatprep.subr.mxu0 0.0
    %847 = vmatpush1.msra.mxu0 0.0
    %848 = vmatprep.subr.mxu0 0.0
    %849 = vmatpush1.msra.mxu0 0.0
    %850 = vmatprep.subr.mxu0 0.0
    %851 = vmatpush1.msra.mxu0 0.0
    %852 = vmatprep.subr.mxu0 0.0
    %853 = vmatpush1.msra.mxu0 0.0
    %854 = vmatprep.subr.mxu0 0.0
    %855 = vmatpush1.msra.mxu0 0.0
    %856 = vmatprep.subr.mxu0 0.0
    %857 = vmatpush1.msra.mxu0 0.0
    %858 = vmatprep.subr.mxu0 0.0
    %859 = vmatpush1.msra.mxu0 0.0
    %860 = vmatprep.subr.mxu0 0.0
    %861 = vmatpush1.msra.mxu0 0.0
    %862 = vmatprep.subr.mxu0 0.0
    %863 = vmatpush1.msra.mxu0 0.0
    %864 = vmatprep.subr.mxu0 0.0
    %865 = vmatpush1.msra.mxu0 0.0
    %866 = vmatprep.subr.mxu0 0.0
    %867 = vmatpush1.msra.mxu0 0.0
    %868 = vmatprep.subr.mxu0 0.0
    %869 = vmatpush1.msra.mxu0 0.0
    %870 = vmatprep.subr.mxu0 0.0
    %871 = vmatpush1.msra.mxu0 0.0
    %872 = vmatprep.subr.mxu0 0.0
    %873 = vmatpush1.msra.mxu0 0.0
    %874 = vmatprep.subr.mxu0 0.0
    %875 = vmatpush1.msra.mxu0 0.0
    %876 = vmatprep.subr.mxu0 0.0
    %877 = vmatpush1.msra.mxu0 0.0
    %878 = vmatprep.subr.mxu0 0.0
    %879 = vmatpush1.msra.mxu0 0.0
    %880 = vmatprep.subr.mxu0 0.0
    %881 = vmatpush1.msra.mxu0 0.0
    %882 = vmatprep.subr.mxu0 0.0
    %883 = vmatpush1.msra.mxu0 0.0
    %884 = vmatprep.subr.mxu0 0.0
    %885 = vmatpush1.msra.mxu0 0.0
    %886 = vmatprep.subr.mxu0 0.0
    %887 = vmatpush1.msra.mxu0 0.0
    %888 = vmatprep.subr.mxu0 0.0
    %889 = vmatpush1.msra.mxu0 0.0
    %890 = vmatprep.subr.mxu0 0.0
    %891 = vmatpush1.msra.mxu0 0.0
    %892 = vmatprep.subr.mxu0 0.0
    %893 = vmatpush1.msra.mxu0 0.0
    %894 = vmatprep.subr.mxu0 0.0
    %895 = vmatpush1.msra.mxu0 0.0
    %896 = vmatprep.subr.mxu0 0.0
    %897 = vmatpush1.msra.mxu0 0.0
    %898 = vmatprep.mubr.f32.mxu0 0.0
    %899 = vmatmul.mubr.f32.gmra.mrb[0].mxu0 %v829
    %v900 = vpop.f32.mrb[0].mxu0
    %v901 = vadd.f32 0.0, %v900
    %v902 = vpop.f32.mrb[0].mxu0
    %903 = vmatprep.mubr.f32.mxu0 0.0
    %904 = vmatmul.mubr.f32.gmra.mrb[0].mxu0 %v832
    %v905 = vpop.f32.mrb[0].mxu0
    %v906 = vadd.f32 0.0, %v905
    %v907 = vpop.f32.mrb[0].mxu0
    %908 = vdwg.mxu0
    %v910 = vsel %vm152, %v415, 0
    %v913 = vsel %vm152, %v491, 0
    %915 = vmatprep.subr.mxu0 0.0
    %916 = vmatpush1.msra.mxu0 %v145
    %917 = vmatprep.subr.mxu0 0.0
    %918 = vmatpush1.msra.mxu0 0.0
    %919 = vmatprep.subr.mxu0 0.0
    %920 = vmatpush1.msra.mxu0 0.0
    %921 = vmatprep.subr.mxu0 0.0
    %922 = vmatpush1.msra.mxu0 0.0
    %923 = vmatprep.subr.mxu0 0.0
    %924 = vmatpush1.msra.mxu0 0.0
    %925 = vmatprep.subr.mxu0 0.0
    %926 = vmatpush1.msra.mxu0 0.0
    %927 = vmatprep.subr.mxu0 0.0
    %928 = vmatpush1.msra.mxu0 0.0
    %929 = vmatprep.subr.mxu0 0.0
    %930 = vmatpush1.msra.mxu0 0.0
    %931 = vmatprep.subr.mxu0 0.0
    %932 = vmatpush1.msra.mxu0 0.0
    %933 = vmatprep.subr.mxu0 0.0
    %934 = vmatpush1.msra.mxu0 0.0
    %935 = vmatprep.subr.mxu0 0.0
    %936 = vmatpush1.msra.mxu0 0.0
    %937 = vmatprep.subr.mxu0 0.0
    %938 = vmatpush1.msra.mxu0 0.0
    %939 = vmatprep.subr.mxu0 0.0
    %940 = vmatpush1.msra.mxu0 0.0
    %941 = vmatprep.subr.mxu0 0.0
    %942 = vmatpush1.msra.mxu0 0.0
    %943 = vmatprep.subr.mxu0 0.0
    %944 = vmatpush1.msra.mxu0 0.0
    %945 = vmatprep.subr.mxu0 0.0
    %946 = vmatpush1.msra.mxu0 0.0
    %947 = vmatprep.subr.mxu0 0.0
    %948 = vmatpush1.msra.mxu0 0.0
    %949 = vmatprep.subr.mxu0 0.0
    %950 = vmatpush1.msra.mxu0 0.0
    %951 = vmatprep.subr.mxu0 0.0
    %952 = vmatpush1.msra.mxu0 0.0
    %953 = vmatprep.subr.mxu0 0.0
    %954 = vmatpush1.msra.mxu0 0.0
    %955 = vmatprep.subr.mxu0 0.0
    %956 = vmatpush1.msra.mxu0 0.0
    %957 = vmatprep.subr.mxu0 0.0
    %958 = vmatpush1.msra.mxu0 0.0
    %959 = vmatprep.subr.mxu0 0.0
    %960 = vmatpush1.msra.mxu0 0.0
    %961 = vmatprep.subr.mxu0 0.0
    %962 = vmatpush1.msra.mxu0 0.0
    %963 = vmatprep.subr.mxu0 0.0
    %964 = vmatpush1.msra.mxu0 0.0
    %965 = vmatprep.subr.mxu0 0.0
    %966 = vmatpush1.msra.mxu0 0.0
    %967 = vmatprep.subr.mxu0 0.0
    %968 = vmatpush1.msra.mxu0 0.0
    %969 = vmatprep.subr.mxu0 0.0
    %970 = vmatpush1.msra.mxu0 0.0
    %971 = vmatprep.subr.mxu0 0.0
    %972 = vmatpush1.msra.mxu0 0.0
    %973 = vmatprep.subr.mxu0 0.0
    %974 = vmatpush1.msra.mxu0 0.0
    %975 = vmatprep.subr.mxu0 0.0
    %976 = vmatpush1.msra.mxu0 0.0
    %977 = vmatprep.subr.mxu0 0.0
    %978 = vmatpush1.msra.mxu0 0.0
    %979 = vmatprep.mubr.f32.mxu0 0.0
    %980 = vmatmul.mubr.f32.gmra.mrb[0].mxu0 %v910
    %v981 = vpop.f32.mrb[0].mxu0
    %v982 = vadd.f32 %v901, %v981
    %v983 = vpop.f32.mrb[0].mxu0
    %984 = vmatprep.mubr.f32.mxu0 0.0
    %985 = vmatmul.mubr.f32.gmra.mrb[0].mxu0 %v913
    %v986 = vpop.f32.mrb[0].mxu0
    %v987 = vadd.f32 %v906, %v986
    %v988 = vpop.f32.mrb[0].mxu0
    %989 = vdwg.mxu0
    %990 = vrot.lane.b32.xlu0 %v137, 112
    %v991 = vpop.permute.xlu0 %990
    %992 = vrot.lane.b32.xlu0 %v137, 80
    %v993 = vpop.permute.xlu0 %992
    %v994 = vsel %vm152, %v991, 0
    %v996 = vsel %vm152, %v993, 0
    %998 = vmatprep.subr.mxu0 0.0
    %999 = vmatpush1.xpose.msra.mxu0 %v996
    %1000 = vmatprep.subr.mxu0 0.0
    %1001 = vmatpush1.xpose.msra.mxu0 0.0
    %1002 = vmatprep.subr.mxu0 0.0
    %1003 = vmatpush1.xpose.msra.mxu0 0.0
    %1004 = vmatprep.subr.mxu0 0.0
    %1005 = vmatpush1.xpose.msra.mxu0 0.0
    %1006 = vmatprep.subr.mxu0 0.0
    %1007 = vmatpush1.xpose.msra.mxu0 0.0
    %1008 = vmatprep.subr.mxu0 0.0
    %1009 = vmatpush1.xpose.msra.mxu0 0.0
    %1010 = vmatprep.subr.mxu0 0.0
    %1011 = vmatpush1.xpose.msra.mxu0 0.0
    %1012 = vmatprep.subr.mxu0 0.0
    %1013 = vmatpush1.xpose.msra.mxu0 0.0
    %1014 = vmatprep.subr.mxu0 0.0
    %1015 = vmatpush1.xpose.msra.mxu0 0.0
    %1016 = vmatprep.subr.mxu0 0.0
    %1017 = vmatpush1.xpose.msra.mxu0 0.0
    %1018 = vmatprep.subr.mxu0 0.0
    %1019 = vmatpush1.xpose.msra.mxu0 0.0
    %1020 = vmatprep.subr.mxu0 0.0
    %1021 = vmatpush1.xpose.msra.mxu0 0.0
    %1022 = vmatprep.subr.mxu0 0.0
    %1023 = vmatpush1.xpose.msra.mxu0 0.0
    %1024 = vmatprep.subr.mxu0 0.0
    %1025 = vmatpush1.xpose.msra.mxu0 0.0
    %1026 = vmatprep.subr.mxu0 0.0
    %1027 = vmatpush1.xpose.msra.mxu0 0.0
    %1028 = vmatprep.subr.mxu0 0.0
    %1029 = vmatpush1.xpose.msra.mxu0 0.0
    %1030 = vmatprep.subr.mxu0 0.0
    %1031 = vmatpush1.xpose.msra.mxu0 0.0
    %1032 = vmatprep.subr.mxu0 0.0
    %1033 = vmatpush1.xpose.msra.mxu0 0.0
    %1034 = vmatprep.subr.mxu0 0.0
    %1035 = vmatpush1.xpose.msra.mxu0 0.0
    %1036 = vmatprep.subr.mxu0 0.0
    %1037 = vmatpush1.xpose.msra.mxu0 0.0
    %1038 = vmatprep.subr.mxu0 0.0
    %1039 = vmatpush1.xpose.msra.mxu0 0.0
    %1040 = vmatprep.subr.mxu0 0.0
    %1041 = vmatpush1.xpose.msra.mxu0 0.0
    %1042 = vmatprep.subr.mxu0 0.0
    %1043 = vmatpush1.xpose.msra.mxu0 0.0
    %1044 = vmatprep.subr.mxu0 0.0
    %1045 = vmatpush1.xpose.msra.mxu0 0.0
    %1046 = vmatprep.subr.mxu0 0.0
    %1047 = vmatpush1.xpose.msra.mxu0 0.0
    %1048 = vmatprep.subr.mxu0 0.0
    %1049 = vmatpush1.xpose.msra.mxu0 0.0
    %1050 = vmatprep.subr.mxu0 0.0
    %1051 = vmatpush1.xpose.msra.mxu0 0.0
    %1052 = vmatprep.subr.mxu0 0.0
    %1053 = vmatpush1.xpose.msra.mxu0 0.0
    %1054 = vmatprep.subr.mxu0 0.0
    %1055 = vmatpush1.xpose.msra.mxu0 0.0
    %1056 = vmatprep.subr.mxu0 0.0
    %1057 = vmatpush1.xpose.msra.mxu0 0.0
    %1058 = vmatprep.subr.mxu0 0.0
    %1059 = vmatpush1.xpose.msra.mxu0 0.0
    %1060 = vmatprep.subr.mxu0 0.0
    %1061 = vmatpush1.xpose.msra.mxu0 0.0
    %1062 = vmatprep.mubr.f32.mxu0 0.0
    %1063 = vmatmul.mubr.f32.gmra.mrb[0].mxu0 %v994
    %v1064 = vpop.f32.mrb[0].mxu0
    %v1065 = vadd.f32 0.0, %v1064
    %v1066 = vpop.f32.mrb[0].mxu0
    %1067 = vdwg.mxu0
    %1068 = vrot.lane.b32.xlu0 %v142, 112
    %v1069 = vpop.permute.xlu0 %1068
    %1070 = vrot.lane.b32.xlu0 %v142, 80
    %v1071 = vpop.permute.xlu0 %1070
    %v1072 = vsel %vm152, %v1069, 0
    %v1074 = vsel %vm152, %v1071, 0
    %1076 = vmatprep.subr.mxu0 0.0
    %1077 = vmatpush1.xpose.msra.mxu0 %v1074
    %1078 = vmatprep.subr.mxu0 0.0
    %1079 = vmatpush1.xpose.msra.mxu0 0.0
    %1080 = vmatprep.subr.mxu0 0.0
    %1081 = vmatpush1.xpose.msra.mxu0 0.0
    %1082 = vmatprep.subr.mxu0 0.0
    %1083 = vmatpush1.xpose.msra.mxu0 0.0
    %1084 = vmatprep.subr.mxu0 0.0
    %1085 = vmatpush1.xpose.msra.mxu0 0.0
    %1086 = vmatprep.subr.mxu0 0.0
    %1087 = vmatpush1.xpose.msra.mxu0 0.0
    %1088 = vmatprep.subr.mxu0 0.0
    %1089 = vmatpush1.xpose.msra.mxu0 0.0
    %1090 = vmatprep.subr.mxu0 0.0
    %1091 = vmatpush1.xpose.msra.mxu0 0.0
    %1092 = vmatprep.subr.mxu0 0.0
    %1093 = vmatpush1.xpose.msra.mxu0 0.0
    %1094 = vmatprep.subr.mxu0 0.0
    %1095 = vmatpush1.xpose.msra.mxu0 0.0
    %1096 = vmatprep.subr.mxu0 0.0
    %1097 = vmatpush1.xpose.msra.mxu0 0.0
    %1098 = vmatprep.subr.mxu0 0.0
    %1099 = vmatpush1.xpose.msra.mxu0 0.0
    %1100 = vmatprep.subr.mxu0 0.0
    %1101 = vmatpush1.xpose.msra.mxu0 0.0
    %1102 = vmatprep.subr.mxu0 0.0
    %1103 = vmatpush1.xpose.msra.mxu0 0.0
    %1104 = vmatprep.subr.mxu0 0.0
    %1105 = vmatpush1.xpose.msra.mxu0 0.0
    %1106 = vmatprep.subr.mxu0 0.0
    %1107 = vmatpush1.xpose.msra.mxu0 0.0
    %1108 = vmatprep.subr.mxu0 0.0
    %1109 = vmatpush1.xpose.msra.mxu0 0.0
    %1110 = vmatprep.subr.mxu0 0.0
    %1111 = vmatpush1.xpose.msra.mxu0 0.0
    %1112 = vmatprep.subr.mxu0 0.0
    %1113 = vmatpush1.xpose.msra.mxu0 0.0
    %1114 = vmatprep.subr.mxu0 0.0
    %1115 = vmatpush1.xpose.msra.mxu0 0.0
    %1116 = vmatprep.subr.mxu0 0.0
    %1117 = vmatpush1.xpose.msra.mxu0 0.0
    %1118 = vmatprep.subr.mxu0 0.0
    %1119 = vmatpush1.xpose.msra.mxu0 0.0
    %1120 = vmatprep.subr.mxu0 0.0
    %1121 = vmatpush1.xpose.msra.mxu0 0.0
    %1122 = vmatprep.subr.mxu0 0.0
    %1123 = vmatpush1.xpose.msra.mxu0 0.0
    %1124 = vmatprep.subr.mxu0 0.0
    %1125 = vmatpush1.xpose.msra.mxu0 0.0
    %1126 = vmatprep.subr.mxu0 0.0
    %1127 = vmatpush1.xpose.msra.mxu0 0.0
    %1128 = vmatprep.subr.mxu0 0.0
    %1129 = vmatpush1.xpose.msra.mxu0 0.0
    %1130 = vmatprep.subr.mxu0 0.0
    %1131 = vmatpush1.xpose.msra.mxu0 0.0
    %1132 = vmatprep.subr.mxu0 0.0
    %1133 = vmatpush1.xpose.msra.mxu0 0.0
    %1134 = vmatprep.subr.mxu0 0.0
    %1135 = vmatpush1.xpose.msra.mxu0 0.0
    %1136 = vmatprep.subr.mxu0 0.0
    %1137 = vmatpush1.xpose.msra.mxu0 0.0
    %1138 = vmatprep.subr.mxu0 0.0
    %1139 = vmatpush1.xpose.msra.mxu0 0.0
    %1140 = vmatprep.mubr.f32.mxu0 0.0
    %1141 = vmatmul.mubr.f32.gmra.mrb[0].mxu0 %v1072
    %v1142 = vpop.f32.mrb[0].mxu0
    %v1143 = vadd.f32 0.0, %v1142
    %v1144 = vpop.f32.mrb[0].mxu0
    %1145 = vdwg.mxu0
    %v1146 = vmul.f32 %v1065, 0.35355338
    %v1147 = vmul.f32 %v1143, 0.35355338
    %v1148 = vadd.f32 %v1146, %v311
    %v1149 = vadd.f32 %v1147, %v315
    %v1150 = vsel %vm152, %v1148, -inf
    %1151 = vmax.xlane.f32.xlu0 %v1150
    %v1152 = vpop.xlane.xlu0 %1151
    %v1153 = vsel %vm152, %v1149, -inf
    %1154 = vmax.xlane.f32.xlu0 %v1153
    %v1155 = vpop.xlane.xlu0 %1154
    %v1156 = vsub.f32 %v1148, %v1152
    %v1157 = vsub.f32 %v1149, %v1155
    %v1158 = vmul.f32 %v1156, 1.442695
    %v1159 = vpow.pop %v1158
    %v1160 = vmul.f32 %v1157, 1.442695
    %v1161 = vpow.pop %v1160
    %v1162 = vsel %vm152, %v1159, 0.0
    %1163 = vadd.xlane.f32.xlu0 %v1162
    %v1164 = vpop.xlane.xlu0 %1163
    %v1165 = vsel %vm152, %v1161, 0.0
    %1166 = vadd.xlane.f32.xlu0 %v1165
    %v1167 = vpop.xlane.xlu0 %1166
    %v1168 = vrcp.pop %v1164
    %v1169 = vrcp.pop %v1167
    %v1170 = vmul.f32 %v1159, %v1168
    %v1171 = vmul.f32 %v1161, %v1169
    %1172 = vrot.lane.b32.xlu0 %v137, 48
    %v1173 = vpop.permute.xlu0 %1172
    %v1176 = vsel %vm152, %v1170, 0
    %1178 = vmatprep.subr.mxu0 0.0
    %1179 = vmatpush1.msra.mxu0 %v1173
    %1180 = vmatprep.subr.mxu0 0.0
    %1181 = vmatpush1.msra.mxu0 0.0
    %1182 = vmatprep.subr.mxu0 0.0
    %1183 = vmatpush1.msra.mxu0 0.0
    %1184 = vmatprep.subr.mxu0 0.0
    %1185 = vmatpush1.msra.mxu0 0.0
    %1186 = vmatprep.subr.mxu0 0.0
    %1187 = vmatpush1.msra.mxu0 0.0
    %1188 = vmatprep.subr.mxu0 0.0
    %1189 = vmatpush1.msra.mxu0 0.0
    %1190 = vmatprep.subr.mxu0 0.0
    %1191 = vmatpush1.msra.mxu0 0.0
    %1192 = vmatprep.subr.mxu0 0.0
    %1193 = vmatpush1.msra.mxu0 0.0
    %1194 = vmatprep.subr.mxu0 0.0
    %1195 = vmatpush1.msra.mxu0 0.0
    %1196 = vmatprep.subr.mxu0 0.0
    %1197 = vmatpush1.msra.mxu0 0.0
    %1198 = vmatprep.subr.mxu0 0.0
    %1199 = vmatpush1.msra.mxu0 0.0
    %1200 = vmatprep.subr.mxu0 0.0
    %1201 = vmatpush1.msra.mxu0 0.0
    %1202 = vmatprep.subr.mxu0 0.0
    %1203 = vmatpush1.msra.mxu0 0.0
    %1204 = vmatprep.subr.mxu0 0.0
    %1205 = vmatpush1.msra.mxu0 0.0
    %1206 = vmatprep.subr.mxu0 0.0
    %1207 = vmatpush1.msra.mxu0 0.0
    %1208 = vmatprep.subr.mxu0 0.0
    %1209 = vmatpush1.msra.mxu0 0.0
    %1210 = vmatprep.subr.mxu0 0.0
    %1211 = vmatpush1.msra.mxu0 0.0
    %1212 = vmatprep.subr.mxu0 0.0
    %1213 = vmatpush1.msra.mxu0 0.0
    %1214 = vmatprep.subr.mxu0 0.0
    %1215 = vmatpush1.msra.mxu0 0.0
    %1216 = vmatprep.subr.mxu0 0.0
    %1217 = vmatpush1.msra.mxu0 0.0
    %1218 = vmatprep.subr.mxu0 0.0
    %1219 = vmatpush1.msra.mxu0 0.0
    %1220 = vmatprep.subr.mxu0 0.0
    %1221 = vmatpush1.msra.mxu0 0.0
    %1222 = vmatprep.subr.mxu0 0.0
    %1223 = vmatpush1.msra.mxu0 0.0
    %1224 = vmatprep.subr.mxu0 0.0
    %1225 = vmatpush1.msra.mxu0 0.0
    %1226 = vmatprep.subr.mxu0 0.0
    %1227 = vmatpush1.msra.mxu0 0.0
    %1228 = vmatprep.subr.mxu0 0.0
    %1229 = vmatpush1.msra.mxu0 0.0
    %1230 = vmatprep.subr.mxu0 0.0
    %1231 = vmatpush1.msra.mxu0 0.0
    %1232 = vmatprep.subr.mxu0 0.0
    %1233 = vmatpush1.msra.mxu0 0.0
    %1234 = vmatprep.subr.mxu0 0.0
    %1235 = vmatpush1.msra.mxu0 0.0
    %1236 = vmatprep.subr.mxu0 0.0
    %1237 = vmatpush1.msra.mxu0 0.0
    %1238 = vmatprep.subr.mxu0 0.0
    %1239 = vmatpush1.msra.mxu0 0.0
    %1240 = vmatprep.subr.mxu0 0.0
    %1241 = vmatpush1.msra.mxu0 0.0
    %1242 = vmatprep.mubr.f32.mxu0 0.0
    %1243 = vmatmul.mubr.f32.gmra.mrb[0].mxu0 %v1176
    %v1244 = vpop.f32.mrb[0].mxu0
    %v1245 = vadd.f32 0.0, %v1244
    %v1246 = vpop.f32.mrb[0].mxu0
    %1247 = vdwg.mxu0
    %1248 = vrot.lane.b32.xlu0 %v142, 48
    %v1249 = vpop.permute.xlu0 %1248
    %v1252 = vsel %vm152, %v1171, 0
    %1254 = vmatprep.subr.mxu0 0.0
    %1255 = vmatpush1.msra.mxu0 %v1249
    %1256 = vmatprep.subr.mxu0 0.0
    %1257 = vmatpush1.msra.mxu0 0.0
    %1258 = vmatprep.subr.mxu0 0.0
    %1259 = vmatpush1.msra.mxu0 0.0
    %1260 = vmatprep.subr.mxu0 0.0
    %1261 = vmatpush1.msra.mxu0 0.0
    %1262 = vmatprep.subr.mxu0 0.0
    %1263 = vmatpush1.msra.mxu0 0.0
    %1264 = vmatprep.subr.mxu0 0.0
    %1265 = vmatpush1.msra.mxu0 0.0
    %1266 = vmatprep.subr.mxu0 0.0
    %1267 = vmatpush1.msra.mxu0 0.0
    %1268 = vmatprep.subr.mxu0 0.0
    %1269 = vmatpush1.msra.mxu0 0.0
    %1270 = vmatprep.subr.mxu0 0.0
    %1271 = vmatpush1.msra.mxu0 0.0
    %1272 = vmatprep.subr.mxu0 0.0
    %1273 = vmatpush1.msra.mxu0 0.0
    %1274 = vmatprep.subr.mxu0 0.0
    %1275 = vmatpush1.msra.mxu0 0.0
    %1276 = vmatprep.subr.mxu0 0.0
    %1277 = vmatpush1.msra.mxu0 0.0
    %1278 = vmatprep.subr.mxu0 0.0
    %1279 = vmatpush1.msra.mxu0 0.0
    %1280 = vmatprep.subr.mxu0 0.0
    %1281 = vmatpush1.msra.mxu0 0.0
    %1282 = vmatprep.subr.mxu0 0.0
    %1283 = vmatpush1.msra.mxu0 0.0
    %1284 = vmatprep.subr.mxu0 0.0
    %1285 = vmatpush1.msra.mxu0 0.0
    %1286 = vmatprep.subr.mxu0 0.0
    %1287 = vmatpush1.msra.mxu0 0.0
    %1288 = vmatprep.subr.mxu0 0.0
    %1289 = vmatpush1.msra.mxu0 0.0
    %1290 = vmatprep.subr.mxu0 0.0
    %1291 = vmatpush1.msra.mxu0 0.0
    %1292 = vmatprep.subr.mxu0 0.0
    %1293 = vmatpush1.msra.mxu0 0.0
    %1294 = vmatprep.subr.mxu0 0.0
    %1295 = vmatpush1.msra.mxu0 0.0
    %1296 = vmatprep.subr.mxu0 0.0
    %1297 = vmatpush1.msra.mxu0 0.0
    %1298 = vmatprep.subr.mxu0 0.0
    %1299 = vmatpush1.msra.mxu0 0.0
    %1300 = vmatprep.subr.mxu0 0.0
    %1301 = vmatpush1.msra.mxu0 0.0
    %1302 = vmatprep.subr.mxu0 0.0
    %1303 = vmatpush1.msra.mxu0 0.0
    %1304 = vmatprep.subr.mxu0 0.0
    %1305 = vmatpush1.msra.mxu0 0.0
    %1306 = vmatprep.subr.mxu0 0.0
    %1307 = vmatpush1.msra.mxu0 0.0
    %1308 = vmatprep.subr.mxu0 0.0
    %1309 = vmatpush1.msra.mxu0 0.0
    %1310 = vmatprep.subr.mxu0 0.0
    %1311 = vmatpush1.msra.mxu0 0.0
    %1312 = vmatprep.subr.mxu0 0.0
    %1313 = vmatpush1.msra.mxu0 0.0
    %1314 = vmatprep.subr.mxu0 0.0
    %1315 = vmatpush1.msra.mxu0 0.0
    %1316 = vmatprep.subr.mxu0 0.0
    %1317 = vmatpush1.msra.mxu0 0.0
    %1318 = vmatprep.mubr.f32.mxu0 0.0
    %1319 = vmatmul.mubr.f32.gmra.mrb[0].mxu0 %v1252
    %v1320 = vpop.f32.mrb[0].mxu0
    %v1321 = vadd.f32 0.0, %v1320
    %v1322 = vpop.f32.mrb[0].mxu0
    %1323 = vdwg.mxu0
    %v1325 = vsel %vm152, %v1245, 0
    %v1328 = vsel %vm152, %v1321, 0
    %1330 = vmatprep.subr.mxu0 0.0
    %1331 = vmatpush1.msra.mxu0 %v147
    %1332 = vmatprep.subr.mxu0 0.0
    %1333 = vmatpush1.msra.mxu0 0.0
    %1334 = vmatprep.subr.mxu0 0.0
    %1335 = vmatpush1.msra.mxu0 0.0
    %1336 = vmatprep.subr.mxu0 0.0
    %1337 = vmatpush1.msra.mxu0 0.0
    %1338 = vmatprep.subr.mxu0 0.0
    %1339 = vmatpush1.msra.mxu0 0.0
    %1340 = vmatprep.subr.mxu0 0.0
    %1341 = vmatpush1.msra.mxu0 0.0
    %1342 = vmatprep.subr.mxu0 0.0
    %1343 = vmatpush1.msra.mxu0 0.0
    %1344 = vmatprep.subr.mxu0 0.0
    %1345 = vmatpush1.msra.mxu0 0.0
    %1346 = vmatprep.subr.mxu0 0.0
    %1347 = vmatpush1.msra.mxu0 0.0
    %1348 = vmatprep.subr.mxu0 0.0
    %1349 = vmatpush1.msra.mxu0 0.0
    %1350 = vmatprep.subr.mxu0 0.0
    %1351 = vmatpush1.msra.mxu0 0.0
    %1352 = vmatprep.subr.mxu0 0.0
    %1353 = vmatpush1.msra.mxu0 0.0
    %1354 = vmatprep.subr.mxu0 0.0
    %1355 = vmatpush1.msra.mxu0 0.0
    %1356 = vmatprep.subr.mxu0 0.0
    %1357 = vmatpush1.msra.mxu0 0.0
    %1358 = vmatprep.subr.mxu0 0.0
    %1359 = vmatpush1.msra.mxu0 0.0
    %1360 = vmatprep.subr.mxu0 0.0
    %1361 = vmatpush1.msra.mxu0 0.0
    %1362 = vmatprep.subr.mxu0 0.0
    %1363 = vmatpush1.msra.mxu0 0.0
    %1364 = vmatprep.subr.mxu0 0.0
    %1365 = vmatpush1.msra.mxu0 0.0
    %1366 = vmatprep.subr.mxu0 0.0
    %1367 = vmatpush1.msra.mxu0 0.0
    %1368 = vmatprep.subr.mxu0 0.0
    %1369 = vmatpush1.msra.mxu0 0.0
    %1370 = vmatprep.subr.mxu0 0.0
    %1371 = vmatpush1.msra.mxu0 0.0
    %1372 = vmatprep.subr.mxu0 0.0
    %1373 = vmatpush1.msra.mxu0 0.0
    %1374 = vmatprep.subr.mxu0 0.0
    %1375 = vmatpush1.msra.mxu0 0.0
    %1376 = vmatprep.subr.mxu0 0.0
    %1377 = vmatpush1.msra.mxu0 0.0
    %1378 = vmatprep.subr.mxu0 0.0
    %1379 = vmatpush1.msra.mxu0 0.0
    %1380 = vmatprep.subr.mxu0 0.0
    %1381 = vmatpush1.msra.mxu0 0.0
    %1382 = vmatprep.subr.mxu0 0.0
    %1383 = vmatpush1.msra.mxu0 0.0
    %1384 = vmatprep.subr.mxu0 0.0
    %1385 = vmatpush1.msra.mxu0 0.0
    %1386 = vmatprep.subr.mxu0 0.0
    %1387 = vmatpush1.msra.mxu0 0.0
    %1388 = vmatprep.subr.mxu0 0.0
    %1389 = vmatpush1.msra.mxu0 0.0
    %1390 = vmatprep.subr.mxu0 0.0
    %1391 = vmatpush1.msra.mxu0 0.0
    %1392 = vmatprep.subr.mxu0 0.0
    %1393 = vmatpush1.msra.mxu0 0.0
    %1394 = vmatprep.mubr.f32.mxu0 0.0
    %1395 = vmatmul.mubr.f32.gmra.mrb[0].mxu0 %v1325
    %v1396 = vpop.f32.mrb[0].mxu0
    %v1397 = vadd.f32 0.0, %v1396
    %v1398 = vpop.f32.mrb[0].mxu0
    %1399 = vmatprep.mubr.f32.mxu0 0.0
    %1400 = vmatmul.mubr.f32.gmra.mrb[0].mxu0 %v1328
    %v1401 = vpop.f32.mrb[0].mxu0
    %v1402 = vadd.f32 0.0, %v1401
    %v1403 = vpop.f32.mrb[0].mxu0
    %1404 = vdwg.mxu0
    %v1405 = vadd.f32 %v982, %v1397
    %v1406 = vadd.f32 %v987, %v1402
    %1407 = vrot.lane.b32.xlu0 %v137, 104
    %v1408 = vpop.permute.xlu0 %1407
    %1409 = vrot.lane.b32.xlu0 %v137, 72
    %v1410 = vpop.permute.xlu0 %1409
    %v1411 = vsel %vm152, %v1408, 0
    %v1413 = vsel %vm152, %v1410, 0
    %1415 = vmatprep.subr.mxu0 0.0
    %1416 = vmatpush1.xpose.msra.mxu0 %v1413
    %1417 = vmatprep.subr.mxu0 0.0
    %1418 = vmatpush1.xpose.msra.mxu0 0.0
    %1419 = vmatprep.subr.mxu0 0.0
    %1420 = vmatpush1.xpose.msra.mxu0 0.0
    %1421 = vmatprep.subr.mxu0 0.0
    %1422 = vmatpush1.xpose.msra.mxu0 0.0
    %1423 = vmatprep.subr.mxu0 0.0
    %1424 = vmatpush1.xpose.msra.mxu0 0.0
    %1425 = vmatprep.subr.mxu0 0.0
    %1426 = vmatpush1.xpose.msra.mxu0 0.0
    %1427 = vmatprep.subr.mxu0 0.0
    %1428 = vmatpush1.xpose.msra.mxu0 0.0
    %1429 = vmatprep.subr.mxu0 0.0
    %1430 = vmatpush1.xpose.msra.mxu0 0.0
    %1431 = vmatprep.subr.mxu0 0.0
    %1432 = vmatpush1.xpose.msra.mxu0 0.0
    %1433 = vmatprep.subr.mxu0 0.0
    %1434 = vmatpush1.xpose.msra.mxu0 0.0
    %1435 = vmatprep.subr.mxu0 0.0
    %1436 = vmatpush1.xpose.msra.mxu0 0.0
    %1437 = vmatprep.subr.mxu0 0.0
    %1438 = vmatpush1.xpose.msra.mxu0 0.0
    %1439 = vmatprep.subr.mxu0 0.0
    %1440 = vmatpush1.xpose.msra.mxu0 0.0
    %1441 = vmatprep.subr.mxu0 0.0
    %1442 = vmatpush1.xpose.msra.mxu0 0.0
    %1443 = vmatprep.subr.mxu0 0.0
    %1444 = vmatpush1.xpose.msra.mxu0 0.0
    %1445 = vmatprep.subr.mxu0 0.0
    %1446 = vmatpush1.xpose.msra.mxu0 0.0
    %1447 = vmatprep.subr.mxu0 0.0
    %1448 = vmatpush1.xpose.msra.mxu0 0.0
    %1449 = vmatprep.subr.mxu0 0.0
    %1450 = vmatpush1.xpose.msra.mxu0 0.0
    %1451 = vmatprep.subr.mxu0 0.0
    %1452 = vmatpush1.xpose.msra.mxu0 0.0
    %1453 = vmatprep.subr.mxu0 0.0
    %1454 = vmatpush1.xpose.msra.mxu0 0.0
    %1455 = vmatprep.subr.mxu0 0.0
    %1456 = vmatpush1.xpose.msra.mxu0 0.0
    %1457 = vmatprep.subr.mxu0 0.0
    %1458 = vmatpush1.xpose.msra.mxu0 0.0
    %1459 = vmatprep.subr.mxu0 0.0
    %1460 = vmatpush1.xpose.msra.mxu0 0.0
    %1461 = vmatprep.subr.mxu0 0.0
    %1462 = vmatpush1.xpose.msra.mxu0 0.0
    %1463 = vmatprep.subr.mxu0 0.0
    %1464 = vmatpush1.xpose.msra.mxu0 0.0
    %1465 = vmatprep.subr.mxu0 0.0
    %1466 = vmatpush1.xpose.msra.mxu0 0.0
    %1467 = vmatprep.subr.mxu0 0.0
    %1468 = vmatpush1.xpose.msra.mxu0 0.0
    %1469 = vmatprep.subr.mxu0 0.0
    %1470 = vmatpush1.xpose.msra.mxu0 0.0
    %1471 = vmatprep.subr.mxu0 0.0
    %1472 = vmatpush1.xpose.msra.mxu0 0.0
    %1473 = vmatprep.subr.mxu0 0.0
    %1474 = vmatpush1.xpose.msra.mxu0 0.0
    %1475 = vmatprep.subr.mxu0 0.0
    %1476 = vmatpush1.xpose.msra.mxu0 0.0
    %1477 = vmatprep.subr.mxu0 0.0
    %1478 = vmatpush1.xpose.msra.mxu0 0.0
    %1479 = vmatprep.mubr.f32.mxu0 0.0
    %1480 = vmatmul.mubr.f32.gmra.mrb[0].mxu0 %v1411
    %v1481 = vpop.f32.mrb[0].mxu0
    %v1482 = vadd.f32 0.0, %v1481
    %v1483 = vpop.f32.mrb[0].mxu0
    %1484 = vdwg.mxu0
    %1485 = vrot.lane.b32.xlu0 %v142, 104
    %v1486 = vpop.permute.xlu0 %1485
    %1487 = vrot.lane.b32.xlu0 %v142, 72
    %v1488 = vpop.permute.xlu0 %1487
    %v1489 = vsel %vm152, %v1486, 0
    %v1491 = vsel %vm152, %v1488, 0
    %1493 = vmatprep.subr.mxu0 0.0
    %1494 = vmatpush1.xpose.msra.mxu0 %v1491
    %1495 = vmatprep.subr.mxu0 0.0
    %1496 = vmatpush1.xpose.msra.mxu0 0.0
    %1497 = vmatprep.subr.mxu0 0.0
    %1498 = vmatpush1.xpose.msra.mxu0 0.0
    %1499 = vmatprep.subr.mxu0 0.0
    %1500 = vmatpush1.xpose.msra.mxu0 0.0
    %1501 = vmatprep.subr.mxu0 0.0
    %1502 = vmatpush1.xpose.msra.mxu0 0.0
    %1503 = vmatprep.subr.mxu0 0.0
    %1504 = vmatpush1.xpose.msra.mxu0 0.0
    %1505 = vmatprep.subr.mxu0 0.0
    %1506 = vmatpush1.xpose.msra.mxu0 0.0
    %1507 = vmatprep.subr.mxu0 0.0
    %1508 = vmatpush1.xpose.msra.mxu0 0.0
    %1509 = vmatprep.subr.mxu0 0.0
    %1510 = vmatpush1.xpose.msra.mxu0 0.0
    %1511 = vmatprep.subr.mxu0 0.0
    %1512 = vmatpush1.xpose.msra.mxu0 0.0
    %1513 = vmatprep.subr.mxu0 0.0
    %1514 = vmatpush1.xpose.msra.mxu0 0.0
    %1515 = vmatprep.subr.mxu0 0.0
    %1516 = vmatpush1.xpose.msra.mxu0 0.0
    %1517 = vmatprep.subr.mxu0 0.0
    %1518 = vmatpush1.xpose.msra.mxu0 0.0
    %1519 = vmatprep.subr.mxu0 0.0
    %1520 = vmatpush1.xpose.msra.mxu0 0.0
    %1521 = vmatprep.subr.mxu0 0.0
    %1522 = vmatpush1.xpose.msra.mxu0 0.0
    %1523 = vmatprep.subr.mxu0 0.0
    %1524 = vmatpush1.xpose.msra.mxu0 0.0
    %1525 = vmatprep.subr.mxu0 0.0
    %1526 = vmatpush1.xpose.msra.mxu0 0.0
    %1527 = vmatprep.subr.mxu0 0.0
    %1528 = vmatpush1.xpose.msra.mxu0 0.0
    %1529 = vmatprep.subr.mxu0 0.0
    %1530 = vmatpush1.xpose.msra.mxu0 0.0
    %1531 = vmatprep.subr.mxu0 0.0
    %1532 = vmatpush1.xpose.msra.mxu0 0.0
    %1533 = vmatprep.subr.mxu0 0.0
    %1534 = vmatpush1.xpose.msra.mxu0 0.0
    %1535 = vmatprep.subr.mxu0 0.0
    %1536 = vmatpush1.xpose.msra.mxu0 0.0
    %1537 = vmatprep.subr.mxu0 0.0
    %1538 = vmatpush1.xpose.msra.mxu0 0.0
    %1539 = vmatprep.subr.mxu0 0.0
    %1540 = vmatpush1.xpose.msra.mxu0 0.0
    %1541 = vmatprep.subr.mxu0 0.0
    %1542 = vmatpush1.xpose.msra.mxu0 0.0
    %1543 = vmatprep.subr.mxu0 0.0
    %1544 = vmatpush1.xpose.msra.mxu0 0.0
    %1545 = vmatprep.subr.mxu0 0.0
    %1546 = vmatpush1.xpose.msra.mxu0 0.0
    %1547 = vmatprep.subr.mxu0 0.0
    %1548 = vmatpush1.xpose.msra.mxu0 0.0
    %1549 = vmatprep.subr.mxu0 0.0
    %1550 = vmatpush1.xpose.msra.mxu0 0.0
    %1551 = vmatprep.subr.mxu0 0.0
    %1552 = vmatpush1.xpose.msra.mxu0 0.0
    %1553 = vmatprep.subr.mxu0 0.0
    %1554 = vmatpush1.xpose.msra.mxu0 0.0
    %1555 = vmatprep.subr.mxu0 0.0
    %1556 = vmatpush1.xpose.msra.mxu0 0.0
    %1557 = vmatprep.mubr.f32.mxu0 0.0
    %1558 = vmatmul.mubr.f32.gmra.mrb[0].mxu0 %v1489
    %v1559 = vpop.f32.mrb[0].mxu0
    %v1560 = vadd.f32 0.0, %v1559
    %v1561 = vpop.f32.mrb[0].mxu0
    %1562 = vdwg.mxu0
    %v1563 = vmul.f32 %v1482, 0.35355338
    %v1564 = vmul.f32 %v1560, 0.35355338
    %v1565 = vadd.f32 %v1563, %v311
    %v1566 = vadd.f32 %v1564, %v315
    %v1567 = vsel %vm152, %v1565, -inf
    %1568 = vmax.xlane.f32.xlu0 %v1567
    %v1569 = vpop.xlane.xlu0 %1568
    %v1570 = vsel %vm152, %v1566, -inf
    %1571 = vmax.xlane.f32.xlu0 %v1570
    %v1572 = vpop.xlane.xlu0 %1571
    %v1573 = vsub.f32 %v1565, %v1569
    %v1574 = vsub.f32 %v1566, %v1572
    %v1575 = vmul.f32 %v1573, 1.442695
    %v1576 = vpow.pop %v1575
    %v1577 = vmul.f32 %v1574, 1.442695
    %v1578 = vpow.pop %v1577
    %v1579 = vsel %vm152, %v1576, 0.0
    %1580 = vadd.xlane.f32.xlu0 %v1579
    %v1581 = vpop.xlane.xlu0 %1580
    %v1582 = vsel %vm152, %v1578, 0.0
    %1583 = vadd.xlane.f32.xlu0 %v1582
    %v1584 = vpop.xlane.xlu0 %1583
    %v1585 = vrcp.pop %v1581
    %v1586 = vrcp.pop %v1584
    %v1587 = vmul.f32 %v1576, %v1585
    %v1588 = vmul.f32 %v1578, %v1586
    %1589 = vrot.lane.b32.xlu0 %v137, 40
    %v1590 = vpop.permute.xlu0 %1589
    %v1593 = vsel %vm152, %v1587, 0
    %1595 = vmatprep.subr.mxu0 0.0
    %1596 = vmatpush1.msra.mxu0 %v1590
    %1597 = vmatprep.subr.mxu0 0.0
    %1598 = vmatpush1.msra.mxu0 0.0
    %1599 = vmatprep.subr.mxu0 0.0
    %1600 = vmatpush1.msra.mxu0 0.0
    %1601 = vmatprep.subr.mxu0 0.0
    %1602 = vmatpush1.msra.mxu0 0.0
    %1603 = vmatprep.subr.mxu0 0.0
    %1604 = vmatpush1.msra.mxu0 0.0
    %1605 = vmatprep.subr.mxu0 0.0
    %1606 = vmatpush1.msra.mxu0 0.0
    %1607 = vmatprep.subr.mxu0 0.0
    %1608 = vmatpush1.msra.mxu0 0.0
    %1609 = vmatprep.subr.mxu0 0.0
    %1610 = vmatpush1.msra.mxu0 0.0
    %1611 = vmatprep.subr.mxu0 0.0
    %1612 = vmatpush1.msra.mxu0 0.0
    %1613 = vmatprep.subr.mxu0 0.0
    %1614 = vmatpush1.msra.mxu0 0.0
    %1615 = vmatprep.subr.mxu0 0.0
    %1616 = vmatpush1.msra.mxu0 0.0
    %1617 = vmatprep.subr.mxu0 0.0
    %1618 = vmatpush1.msra.mxu0 0.0
    %1619 = vmatprep.subr.mxu0 0.0
    %1620 = vmatpush1.msra.mxu0 0.0
    %1621 = vmatprep.subr.mxu0 0.0
    %1622 = vmatpush1.msra.mxu0 0.0
    %1623 = vmatprep.subr.mxu0 0.0
    %1624 = vmatpush1.msra.mxu0 0.0
    %1625 = vmatprep.subr.mxu0 0.0
    %1626 = vmatpush1.msra.mxu0 0.0
    %1627 = vmatprep.subr.mxu0 0.0
    %1628 = vmatpush1.msra.mxu0 0.0
    %1629 = vmatprep.subr.mxu0 0.0
    %1630 = vmatpush1.msra.mxu0 0.0
    %1631 = vmatprep.subr.mxu0 0.0
    %1632 = vmatpush1.msra.mxu0 0.0
    %1633 = vmatprep.subr.mxu0 0.0
    %1634 = vmatpush1.msra.mxu0 0.0
    %1635 = vmatprep.subr.mxu0 0.0
    %1636 = vmatpush1.msra.mxu0 0.0
    %1637 = vmatprep.subr.mxu0 0.0
    %1638 = vmatpush1.msra.mxu0 0.0
    %1639 = vmatprep.subr.mxu0 0.0
    %1640 = vmatpush1.msra.mxu0 0.0
    %1641 = vmatprep.subr.mxu0 0.0
    %1642 = vmatpush1.msra.mxu0 0.0
    %1643 = vmatprep.subr.mxu0 0.0
    %1644 = vmatpush1.msra.mxu0 0.0
    %1645 = vmatprep.subr.mxu0 0.0
    %1646 = vmatpush1.msra.mxu0 0.0
    %1647 = vmatprep.subr.mxu0 0.0
    %1648 = vmatpush1.msra.mxu0 0.0
    %1649 = vmatprep.subr.mxu0 0.0
    %1650 = vmatpush1.msra.mxu0 0.0
    %1651 = vmatprep.subr.mxu0 0.0
    %1652 = vmatpush1.msra.mxu0 0.0
    %1653 = vmatprep.subr.mxu0 0.0
    %1654 = vmatpush1.msra.mxu0 0.0
    %1655 = vmatprep.subr.mxu0 0.0
    %1656 = vmatpush1.msra.mxu0 0.0
    %1657 = vmatprep.subr.mxu0 0.0
    %1658 = vmatpush1.msra.mxu0 0.0
    %1659 = vmatprep.mubr.f32.mxu0 0.0
    %1660 = vmatmul.mubr.f32.gmra.mrb[0].mxu0 %v1593
    %v1661 = vpop.f32.mrb[0].mxu0
    %v1662 = vadd.f32 0.0, %v1661
    %v1663 = vpop.f32.mrb[0].mxu0
    %1664 = vdwg.mxu0
    %1665 = vrot.lane.b32.xlu0 %v142, 40
    %v1666 = vpop.permute.xlu0 %1665
    %v1669 = vsel %vm152, %v1588, 0
    %1671 = vmatprep.subr.mxu0 0.0
    %1672 = vmatpush1.msra.mxu0 %v1666
    %1673 = vmatprep.subr.mxu0 0.0
    %1674 = vmatpush1.msra.mxu0 0.0
    %1675 = vmatprep.subr.mxu0 0.0
    %1676 = vmatpush1.msra.mxu0 0.0
    %1677 = vmatprep.subr.mxu0 0.0
    %1678 = vmatpush1.msra.mxu0 0.0
    %1679 = vmatprep.subr.mxu0 0.0
    %1680 = vmatpush1.msra.mxu0 0.0
    %1681 = vmatprep.subr.mxu0 0.0
    %1682 = vmatpush1.msra.mxu0 0.0
    %1683 = vmatprep.subr.mxu0 0.0
    %1684 = vmatpush1.msra.mxu0 0.0
    %1685 = vmatprep.subr.mxu0 0.0
    %1686 = vmatpush1.msra.mxu0 0.0
    %1687 = vmatprep.subr.mxu0 0.0
    %1688 = vmatpush1.msra.mxu0 0.0
    %1689 = vmatprep.subr.mxu0 0.0
    %1690 = vmatpush1.msra.mxu0 0.0
    %1691 = vmatprep.subr.mxu0 0.0
    %1692 = vmatpush1.msra.mxu0 0.0
    %1693 = vmatprep.subr.mxu0 0.0
    %1694 = vmatpush1.msra.mxu0 0.0
    %1695 = vmatprep.subr.mxu0 0.0
    %1696 = vmatpush1.msra.mxu0 0.0
    %1697 = vmatprep.subr.mxu0 0.0
    %1698 = vmatpush1.msra.mxu0 0.0
    %1699 = vmatprep.subr.mxu0 0.0
    %1700 = vmatpush1.msra.mxu0 0.0
    %1701 = vmatprep.subr.mxu0 0.0
    %1702 = vmatpush1.msra.mxu0 0.0
    %1703 = vmatprep.subr.mxu0 0.0
    %1704 = vmatpush1.msra.mxu0 0.0
    %1705 = vmatprep.subr.mxu0 0.0
    %1706 = vmatpush1.msra.mxu0 0.0
    %1707 = vmatprep.subr.mxu0 0.0
    %1708 = vmatpush1.msra.mxu0 0.0
    %1709 = vmatprep.subr.mxu0 0.0
    %1710 = vmatpush1.msra.mxu0 0.0
    %1711 = vmatprep.subr.mxu0 0.0
    %1712 = vmatpush1.msra.mxu0 0.0
    %1713 = vmatprep.subr.mxu0 0.0
    %1714 = vmatpush1.msra.mxu0 0.0
    %1715 = vmatprep.subr.mxu0 0.0
    %1716 = vmatpush1.msra.mxu0 0.0
    %1717 = vmatprep.subr.mxu0 0.0
    %1718 = vmatpush1.msra.mxu0 0.0
    %1719 = vmatprep.subr.mxu0 0.0
    %1720 = vmatpush1.msra.mxu0 0.0
    %1721 = vmatprep.subr.mxu0 0.0
    %1722 = vmatpush1.msra.mxu0 0.0
    %1723 = vmatprep.subr.mxu0 0.0
    %1724 = vmatpush1.msra.mxu0 0.0
    %1725 = vmatprep.subr.mxu0 0.0
    %1726 = vmatpush1.msra.mxu0 0.0
    %1727 = vmatprep.subr.mxu0 0.0
    %1728 = vmatpush1.msra.mxu0 0.0
    %1729 = vmatprep.subr.mxu0 0.0
    %1730 = vmatpush1.msra.mxu0 0.0
    %1731 = vmatprep.subr.mxu0 0.0
    %1732 = vmatpush1.msra.mxu0 0.0
    %1733 = vmatprep.subr.mxu0 0.0
    %1734 = vmatpush1.msra.mxu0 0.0
    %1735 = vmatprep.mubr.f32.mxu0 0.0
    %1736 = vmatmul.mubr.f32.gmra.mrb[0].mxu0 %v1669
    %v1737 = vpop.f32.mrb[0].mxu0
    %v1738 = vadd.f32 0.0, %v1737
    %v1739 = vpop.f32.mrb[0].mxu0
    %1740 = vdwg.mxu0
    %v1742 = vsel %vm152, %v1662, 0
    %v1745 = vsel %vm152, %v1738, 0
    %1747 = vmatprep.subr.mxu0 0.0
    %1748 = vmatpush1.msra.mxu0 %v148
    %1749 = vmatprep.subr.mxu0 0.0
    %1750 = vmatpush1.msra.mxu0 0.0
    %1751 = vmatprep.subr.mxu0 0.0
    %1752 = vmatpush1.msra.mxu0 0.0
    %1753 = vmatprep.subr.mxu0 0.0
    %1754 = vmatpush1.msra.mxu0 0.0
    %1755 = vmatprep.subr.mxu0 0.0
    %1756 = vmatpush1.msra.mxu0 0.0
    %1757 = vmatprep.subr.mxu0 0.0
    %1758 = vmatpush1.msra.mxu0 0.0
    %1759 = vmatprep.subr.mxu0 0.0
    %1760 = vmatpush1.msra.mxu0 0.0
    %1761 = vmatprep.subr.mxu0 0.0
    %1762 = vmatpush1.msra.mxu0 0.0
    %1763 = vmatprep.subr.mxu0 0.0
    %1764 = vmatpush1.msra.mxu0 0.0
    %1765 = vmatprep.subr.mxu0 0.0
    %1766 = vmatpush1.msra.mxu0 0.0
    %1767 = vmatprep.subr.mxu0 0.0
    %1768 = vmatpush1.msra.mxu0 0.0
    %1769 = vmatprep.subr.mxu0 0.0
    %1770 = vmatpush1.msra.mxu0 0.0
    %1771 = vmatprep.subr.mxu0 0.0
    %1772 = vmatpush1.msra.mxu0 0.0
    %1773 = vmatprep.subr.mxu0 0.0
    %1774 = vmatpush1.msra.mxu0 0.0
    %1775 = vmatprep.subr.mxu0 0.0
    %1776 = vmatpush1.msra.mxu0 0.0
    %1777 = vmatprep.subr.mxu0 0.0
    %1778 = vmatpush1.msra.mxu0 0.0
    %1779 = vmatprep.subr.mxu0 0.0
    %1780 = vmatpush1.msra.mxu0 0.0
    %1781 = vmatprep.subr.mxu0 0.0
    %1782 = vmatpush1.msra.mxu0 0.0
    %1783 = vmatprep.subr.mxu0 0.0
    %1784 = vmatpush1.msra.mxu0 0.0
    %1785 = vmatprep.subr.mxu0 0.0
    %1786 = vmatpush1.msra.mxu0 0.0
    %1787 = vmatprep.subr.mxu0 0.0
    %1788 = vmatpush1.msra.mxu0 0.0
    %1789 = vmatprep.subr.mxu0 0.0
    %1790 = vmatpush1.msra.mxu0 0.0
    %1791 = vmatprep.subr.mxu0 0.0
    %1792 = vmatpush1.msra.mxu0 0.0
    %1793 = vmatprep.subr.mxu0 0.0
    %1794 = vmatpush1.msra.mxu0 0.0
    %1795 = vmatprep.subr.mxu0 0.0
    %1796 = vmatpush1.msra.mxu0 0.0
    %1797 = vmatprep.subr.mxu0 0.0
    %1798 = vmatpush1.msra.mxu0 0.0
    %1799 = vmatprep.subr.mxu0 0.0
    %1800 = vmatpush1.msra.mxu0 0.0
    %1801 = vmatprep.subr.mxu0 0.0
    %1802 = vmatpush1.msra.mxu0 0.0
    %1803 = vmatprep.subr.mxu0 0.0
    %1804 = vmatpush1.msra.mxu0 0.0
    %1805 = vmatprep.subr.mxu0 0.0
    %1806 = vmatpush1.msra.mxu0 0.0
    %1807 = vmatprep.subr.mxu0 0.0
    %1808 = vmatpush1.msra.mxu0 0.0
    %1809 = vmatprep.subr.mxu0 0.0
    %1810 = vmatpush1.msra.mxu0 0.0
    %1811 = vmatprep.mubr.f32.mxu0 0.0
    %1812 = vmatmul.mubr.f32.gmra.mrb[0].mxu0 %v1742
    %v1813 = vpop.f32.mrb[0].mxu0
    %v1814 = vadd.f32 0.0, %v1813
    %v1815 = vpop.f32.mrb[0].mxu0
    %1816 = vmatprep.mubr.f32.mxu0 0.0
    %1817 = vmatmul.mubr.f32.gmra.mrb[0].mxu0 %v1745
    %v1818 = vpop.f32.mrb[0].mxu0
    %v1819 = vadd.f32 0.0, %v1818
    %v1820 = vpop.f32.mrb[0].mxu0
    %1821 = vdwg.mxu0
    %v1822 = vadd.f32 %v1405, %v1814
    %v1823 = vadd.f32 %v1406, %v1819
    %v1824 = vld [vmem:[%s5] sm:$0x1]
    %v1826 = vlaneseq
    %v1827 = vshrl.u32 %v1826, 7
    %v1828 = vsub.s32 0, %v1827
    %v1829 = vrot.slane %v1824, %v1828
    %v1831 = vadd.f32 %v1822, %v1829
    %v1832 = vadd.f32 %v1823, %v1829
    %v1833 = vadd.f32 %v48, %v1831
    %v1834 = vadd.f32 %v49, %v1832
    %v1835 = vld [vmem:[%s10] sm:$0x1]
    %v1836 = vld [vmem:[%s11] sm:$0x1]
    %v1837 = vsel %vm63, %v1833, 0.0
    %1838 = vadd.xlane.f32.xlu0 %v1837
    %v1839 = vpop.xlane.xlu0 %1838
    %v1840 = vsel %vm63, %v1834, 0.0
    %1841 = vadd.xlane.f32.xlu0 %v1840
    %v1842 = vpop.xlane.xlu0 %1841
    %v1843 = vrcp.pop 32.0
    %v1844 = vmul.f32 %v1839, %v1843
    %v1845 = vmul.f32 %v1842, %v1843
    %v1846 = vsub.f32 %v1833, %v1844
    %v1847 = vsub.f32 %v1834, %v1845
    %v1848 = vmul.f32 %v1846, %v1846
    %v1849 = vmul.f32 %v1847, %v1847
    %v1850 = vsel %vm63, %v1848, 0.0
    %1851 = vadd.xlane.f32.xlu0 %v1850
    %v1852 = vpop.xlane.xlu0 %1851
    %v1853 = vsel %vm63, %v1849, 0.0
    %1854 = vadd.xlane.f32.xlu0 %v1853
    %v1855 = vpop.xlane.xlu0 %1854
    %v1856 = vmul.f32 %v1852, 0.032258064
    %v1857 = vmul.f32 %v1855, 0.032258064
    %v1858 = vrsqrt.pop %v1856
    %v1859 = vmul.f32 %v1856, %v1858
    %vm1860 = vcmp.eq.f32.partialorder %v1856, inf
    %v1861 = vsel %vm1860, %v1856, %v1859
    %vm1862 = vcmp.eq.f32.partialorder %v1856, 0.0
    %v1863 = vand.u32 %v1856, 2147483648
    %v1864 = vsel %vm1862, %v1863, %v1861
    %v1865 = vrsqrt.pop %v1857
    %v1866 = vmul.f32 %v1857, %v1865
    %vm1867 = vcmp.eq.f32.partialorder %v1857, inf
    %v1868 = vsel %vm1867, %v1857, %v1866
    %vm1869 = vcmp.eq.f32.partialorder %v1857, 0.0
    %v1870 = vand.u32 %v1857, 2147483648
    %v1871 = vsel %vm1869, %v1870, %v1868
    %v1872 = vadd.f32 %v1864, 1e-06
    %v1873 = vadd.f32 %v1871, 1e-06
    %v1874 = vrcp.pop %v1872
    %v1875 = vrcp.pop %v1873
    %v1876 = vmul.f32 %v1846, %v1874
    %v1877 = vmul.f32 %v1847, %v1875
    %v1879 = vlaneseq
    %v1880 = vshrl.u32 %v1879, 7
    %v1881 = vsub.s32 0, %v1880
    %v1882 = vrot.slane %v1835, %v1881
    %v1884 = vmul.f32 %v1882, %v1876
    %v1885 = vmul.f32 %v1882, %v1877
    %v1887 = vlaneseq
    %v1888 = vshrl.u32 %v1887, 7
    %v1889 = vsub.s32 0, %v1888
    %v1890 = vrot.slane %v1836, %v1889
    %v1892 = vadd.f32 %v1884, %v1890
    %v1893 = vadd.f32 %v1885, %v1890
    %v1894 = vld [vmem:[%s6] sm:$0xff]
    %v1895 = vld [vmem:[%s6 + $0x8] sm:$0xff]
    %v1896 = vld [vmem:[%s6 + $0x10] sm:$0xff]
    %v1897 = vld [vmem:[%s6 + $0x18] sm:$0xff]
    %v1898 = vld [vmem:[%s7] sm:$0x1]
    %v1900 = vlaneseq
    %v1901 = vshrl.u32 %v1900, 7
    %v1902 = vsub.s32 0, %v1901
    %v1903 = vrot.slane %v1898, %v1902
    %v1906 = vsel %vm63, %v1892, 0
    %v1909 = vsel %vm63, %v1893, 0
    %1911 = vmatprep.subr.mxu0 0.0
    %1912 = vmatpush1.msra.mxu0 %v1894
    %1913 = vmatprep.subr.mxu0 0.0
    %1914 = vmatpush1.msra.mxu0 %v1895
    %1915 = vmatprep.subr.mxu0 0.0
    %1916 = vmatpush1.msra.mxu0 %v1896
    %1917 = vmatprep.subr.mxu0 0.0
    %1918 = vmatpush1.msra.mxu0 %v1897
    %1919 = vmatprep.subr.mxu0 0.0
    %1920 = vmatpush1.msra.mxu0 0.0
    %1921 = vmatprep.subr.mxu0 0.0
    %1922 = vmatpush1.msra.mxu0 0.0
    %1923 = vmatprep.subr.mxu0 0.0
    %1924 = vmatpush1.msra.mxu0 0.0
    %1925 = vmatprep.subr.mxu0 0.0
    %1926 = vmatpush1.msra.mxu0 0.0
    %1927 = vmatprep.subr.mxu0 0.0
    %1928 = vmatpush1.msra.mxu0 0.0
    %1929 = vmatprep.subr.mxu0 0.0
    %1930 = vmatpush1.msra.mxu0 0.0
    %1931 = vmatprep.subr.mxu0 0.0
    %1932 = vmatpush1.msra.mxu0 0.0
    %1933 = vmatprep.subr.mxu0 0.0
    %1934 = vmatpush1.msra.mxu0 0.0
    %1935 = vmatprep.subr.mxu0 0.0
    %1936 = vmatpush1.msra.mxu0 0.0
    %1937 = vmatprep.subr.mxu0 0.0
    %1938 = vmatpush1.msra.mxu0 0.0
    %1939 = vmatprep.subr.mxu0 0.0
    %1940 = vmatpush1.msra.mxu0 0.0
    %1941 = vmatprep.subr.mxu0 0.0
    %1942 = vmatpush1.msra.mxu0 0.0
    %1943 = vmatprep.subr.mxu0 0.0
    %1944 = vmatpush1.msra.mxu0 0.0
    %1945 = vmatprep.subr.mxu0 0.0
    %1946 = vmatpush1.msra.mxu0 0.0
    %1947 = vmatprep.subr.mxu0 0.0
    %1948 = vmatpush1.msra.mxu0 0.0
    %1949 = vmatprep.subr.mxu0 0.0
    %1950 = vmatpush1.msra.mxu0 0.0
    %1951 = vmatprep.subr.mxu0 0.0
    %1952 = vmatpush1.msra.mxu0 0.0
    %1953 = vmatprep.subr.mxu0 0.0
    %1954 = vmatpush1.msra.mxu0 0.0
    %1955 = vmatprep.subr.mxu0 0.0
    %1956 = vmatpush1.msra.mxu0 0.0
    %1957 = vmatprep.subr.mxu0 0.0
    %1958 = vmatpush1.msra.mxu0 0.0
    %1959 = vmatprep.subr.mxu0 0.0
    %1960 = vmatpush1.msra.mxu0 0.0
    %1961 = vmatprep.subr.mxu0 0.0
    %1962 = vmatpush1.msra.mxu0 0.0
    %1963 = vmatprep.subr.mxu0 0.0
    %1964 = vmatpush1.msra.mxu0 0.0
    %1965 = vmatprep.subr.mxu0 0.0
    %1966 = vmatpush1.msra.mxu0 0.0
    %1967 = vmatprep.subr.mxu0 0.0
    %1968 = vmatpush1.msra.mxu0 0.0
    %1969 = vmatprep.subr.mxu0 0.0
    %1970 = vmatpush1.msra.mxu0 0.0
    %1971 = vmatprep.subr.mxu0 0.0
    %1972 = vmatpush1.msra.mxu0 0.0
    %1973 = vmatprep.subr.mxu0 0.0
    %1974 = vmatpush1.msra.mxu0 0.0
    %1975 = vmatprep.mubr.f32.mxu0 0.0
    %1976 = vmatmul.mubr.f32.gmra.mrb[0].mxu0 %v1906
    %v1977 = vpop.f32.mrb[0].mxu0
    %v1978 = vadd.f32 %v1903, %v1977
    %v1979 = vpop.f32.mrb[0].mxu0
    %1980 = vmatprep.mubr.f32.mxu0 0.0
    %1981 = vmatmul.mubr.f32.gmra.mrb[0].mxu0 %v1909
    %v1982 = vpop.f32.mrb[0].mxu0
    %v1983 = vadd.f32 %v1903, %v1982
    %v1984 = vpop.f32.mrb[0].mxu0
    %1985 = vdwg.mxu0
    %v1986 = vmax.f32 %v1978, 0.0
    %v1987 = vmax.f32 %v1983, 0.0
    %v1988 = vld [vmem:[%s8] sm:$0xff]
    %v1989 = vld [vmem:[%s8 + $0x8] sm:$0xff]
    %v1990 = vld [vmem:[%s8 + $0x10] sm:$0xff]
    %v1991 = vld [vmem:[%s8 + $0x18] sm:$0xff]
    %v1992 = vld [vmem:[%s8 + $0x20] sm:$0xff]
    %v1993 = vld [vmem:[%s8 + $0x28] sm:$0xff]
    %v1994 = vld [vmem:[%s8 + $0x30] sm:$0xff]
    %v1995 = vld [vmem:[%s8 + $0x38] sm:$0xff]
    %v1996 = vld [vmem:[%s9] sm:$0x1]
    %v1998 = vlaneseq
    %v1999 = vshrl.u32 %v1998, 7
    %v2000 = vsub.s32 0, %v1999
    %v2001 = vrot.slane %v1996, %v2000
    %vm2003 = vcmask 523264
    %v2005 = vsel %vm2003, %v1986, 0
    %v2008 = vsel %vm2003, %v1987, 0
    %2010 = vmatprep.subr.mxu0 0.0
    %2011 = vmatpush1.msra.mxu0 %v1988
    %2012 = vmatprep.subr.mxu0 0.0
    %2013 = vmatpush1.msra.mxu0 %v1989
    %2014 = vmatprep.subr.mxu0 0.0
    %2015 = vmatpush1.msra.mxu0 %v1990
    %2016 = vmatprep.subr.mxu0 0.0
    %2017 = vmatpush1.msra.mxu0 %v1991
    %2018 = vmatprep.subr.mxu0 0.0
    %2019 = vmatpush1.msra.mxu0 %v1992
    %2020 = vmatprep.subr.mxu0 0.0
    %2021 = vmatpush1.msra.mxu0 %v1993
    %2022 = vmatprep.subr.mxu0 0.0
    %2023 = vmatpush1.msra.mxu0 %v1994
    %2024 = vmatprep.subr.mxu0 0.0
    %2025 = vmatpush1.msra.mxu0 %v1995
    %2026 = vmatprep.subr.mxu0 0.0
    %2027 = vmatpush1.msra.mxu0 0.0
    %2028 = vmatprep.subr.mxu0 0.0
    %2029 = vmatpush1.msra.mxu0 0.0
    %2030 = vmatprep.subr.mxu0 0.0
    %2031 = vmatpush1.msra.mxu0 0.0
    %2032 = vmatprep.subr.mxu0 0.0
    %2033 = vmatpush1.msra.mxu0 0.0
    %2034 = vmatprep.subr.mxu0 0.0
    %2035 = vmatpush1.msra.mxu0 0.0
    %2036 = vmatprep.subr.mxu0 0.0
    %2037 = vmatpush1.msra.mxu0 0.0
    %2038 = vmatprep.subr.mxu0 0.0
    %2039 = vmatpush1.msra.mxu0 0.0
    %2040 = vmatprep.subr.mxu0 0.0
    %2041 = vmatpush1.msra.mxu0 0.0
    %2042 = vmatprep.subr.mxu0 0.0
    %2043 = vmatpush1.msra.mxu0 0.0
    %2044 = vmatprep.subr.mxu0 0.0
    %2045 = vmatpush1.msra.mxu0 0.0
    %2046 = vmatprep.subr.mxu0 0.0
    %2047 = vmatpush1.msra.mxu0 0.0
    %2048 = vmatprep.subr.mxu0 0.0
    %2049 = vmatpush1.msra.mxu0 0.0
    %2050 = vmatprep.subr.mxu0 0.0
    %2051 = vmatpush1.msra.mxu0 0.0
    %2052 = vmatprep.subr.mxu0 0.0
    %2053 = vmatpush1.msra.mxu0 0.0
    %2054 = vmatprep.subr.mxu0 0.0
    %2055 = vmatpush1.msra.mxu0 0.0
    %2056 = vmatprep.subr.mxu0 0.0
    %2057 = vmatpush1.msra.mxu0 0.0
    %2058 = vmatprep.subr.mxu0 0.0
    %2059 = vmatpush1.msra.mxu0 0.0
    %2060 = vmatprep.subr.mxu0 0.0
    %2061 = vmatpush1.msra.mxu0 0.0
    %2062 = vmatprep.subr.mxu0 0.0
    %2063 = vmatpush1.msra.mxu0 0.0
    %2064 = vmatprep.subr.mxu0 0.0
    %2065 = vmatpush1.msra.mxu0 0.0
    %2066 = vmatprep.subr.mxu0 0.0
    %2067 = vmatpush1.msra.mxu0 0.0
    %2068 = vmatprep.subr.mxu0 0.0
    %2069 = vmatpush1.msra.mxu0 0.0
    %2070 = vmatprep.subr.mxu0 0.0
    %2071 = vmatpush1.msra.mxu0 0.0
    %2072 = vmatprep.subr.mxu0 0.0
    %2073 = vmatpush1.msra.mxu0 0.0
    %2074 = vmatprep.mubr.f32.mxu0 0.0
    %2075 = vmatmul.mubr.f32.gmra.mrb[0].mxu0 %v2005
    %v2076 = vpop.f32.mrb[0].mxu0
    %v2077 = vadd.f32 %v2001, %v2076
    %v2078 = vpop.f32.mrb[0].mxu0
    %2079 = vmatprep.mubr.f32.mxu0 0.0
    %2080 = vmatmul.mubr.f32.gmra.mrb[0].mxu0 %v2008
    %v2081 = vpop.f32.mrb[0].mxu0
    %v2082 = vadd.f32 %v2001, %v2081
    %v2083 = vpop.f32.mrb[0].mxu0
    %2084 = vdwg.mxu0
    %v2085 = vadd.f32 %v1892, %v2077
    %v2086 = vadd.f32 %v1893, %v2082
    %v2087 = vld [vmem:[%s12] sm:$0x1]
    %v2088 = vld [vmem:[%s13] sm:$0x1]
    %v2089 = vsel %vm63, %v2085, 0.0
    %2090 = vadd.xlane.f32.xlu0 %v2089
    %v2091 = vpop.xlane.xlu0 %2090
    %v2092 = vsel %vm63, %v2086, 0.0
    %2093 = vadd.xlane.f32.xlu0 %v2092
    %v2094 = vpop.xlane.xlu0 %2093
    %v2095 = vmul.f32 %v2091, %v1843
    %v2096 = vmul.f32 %v2094, %v1843
    %v2097 = vsub.f32 %v2085, %v2095
    %v2098 = vsub.f32 %v2086, %v2096
    %v2099 = vmul.f32 %v2097, %v2097
    %v2100 = vmul.f32 %v2098, %v2098
    %v2101 = vsel %vm63, %v2099, 0.0
    %2102 = vadd.xlane.f32.xlu0 %v2101
    %v2103 = vpop.xlane.xlu0 %2102
    %v2104 = vsel %vm63, %v2100, 0.0
    %2105 = vadd.xlane.f32.xlu0 %v2104
    %v2106 = vpop.xlane.xlu0 %2105
    %v2107 = vmul.f32 %v2103, 0.032258064
    %v2108 = vmul.f32 %v2106, 0.032258064
    %v2109 = vrsqrt.pop %v2107
    %v2110 = vmul.f32 %v2107, %v2109
    %vm2111 = vcmp.eq.f32.partialorder %v2107, inf
    %v2112 = vsel %vm2111, %v2107, %v2110
    %vm2113 = vcmp.eq.f32.partialorder %v2107, 0.0
    %v2114 = vand.u32 %v2107, 2147483648
    %v2115 = vsel %vm2113, %v2114, %v2112
    %v2116 = vrsqrt.pop %v2108
    %v2117 = vmul.f32 %v2108, %v2116
    %vm2118 = vcmp.eq.f32.partialorder %v2108, inf
    %v2119 = vsel %vm2118, %v2108, %v2117
    %vm2120 = vcmp.eq.f32.partialorder %v2108, 0.0
    %v2121 = vand.u32 %v2108, 2147483648
    %v2122 = vsel %vm2120, %v2121, %v2119
    %v2123 = vadd.f32 %v2115, 1e-06
    %v2124 = vadd.f32 %v2122, 1e-06
    %v2125 = vrcp.pop %v2123
    %v2126 = vrcp.pop %v2124
    %v2127 = vmul.f32 %v2097, %v2125
    %v2128 = vmul.f32 %v2098, %v2126
    %v2130 = vlaneseq
    %v2131 = vshrl.u32 %v2130, 7
    %v2132 = vsub.s32 0, %v2131
    %v2133 = vrot.slane %v2087, %v2132
    %v2135 = vmul.f32 %v2133, %v2127
    %v2136 = vmul.f32 %v2133, %v2128
    %v2138 = vlaneseq
    %v2139 = vshrl.u32 %v2138, 7
    %v2140 = vsub.s32 0, %v2139
    %v2141 = vrot.slane %v2088, %v2140
    %v2143 = vadd.f32 %v2135, %v2141
    %v2144 = vadd.f32 %v2136, %v2141
    %2145 = vst.msk [vmem:[#allocation2] sm:$0xff] %vm63, %v2143
    %2146 = vst.msk [vmem:[#allocation2 + $0x8] sm:$0xff] %vm63, %v2144
    // Predicated region
    $region58: #{sa_forward.1} parent=1 // pred_check
      _
    $region59: #{sa_forward.1} parent=1 // pred_check_branch
      %2148 = sbr.rel (0) target = $region61
    $region60: #{sa_forward.1} parent=1 // pred_region
      %s2150 = ssub.s32 256, 256
      %2151 = vsyncadd [#allocation3], %s2150
      %s2152 = sshll.u32 [#allocation2], 4
      %s2153 = int_to_ptr.vmem [resolvable:$true] %s2152
      %2158 = dma.vmem_to_hbm [thread:$0]  %s2153, 256, %s14, [#allocation3], 128, 128, 8
    $region61: #{sa_forward.1} parent=1 // pred_fallthru
      _
    // Predicated region
    $region62: #{sa_forward.1} parent=1 // pred_check
      _
    $region63: #{sa_forward.1} parent=1 // pred_check_branch
      %2160 = sbr.rel (0) target = $region65
    $region64: #{sa_forward.1} parent=1 // pred_region
      %2161 = dma.done [#allocation3], 256
    $region65: #{sa_forward.1} parent=1 // pred_fallthru
      _
    %2162 = vsyncpa [#allocation3], 1

</llo_original>
